<compile_context>
chip_gen: v5e
topology: v5e:2x2
jax: 0.10.0
libtpu: 0.0.40
codegen_flags: <defaults>
</compile_context>

<pallas_src>
import math

import numpy as np
import jax
import jax.numpy as jnp
from jax import lax
from jax.experimental import pallas as pl
from jax.experimental.pallas import tpu as pltpu


def _round_up(x, m):
    return (x + m - 1) // m * m


def _pick_tile(dim, cap):
    """Largest multiple-of-128 divisor of `dim` that is <= cap (dim % 128 == 0)."""
    assert dim % 128 == 0
    t = min(dim, max(128, (cap // 128) * 128))
    while dim % t:
        t -= 128
    return t


# --------------------------------------------------------------------------- #
# Kernel A: fused QKV projection  y = x @ Wqkv + b  (rows x cols x K tiled)
# --------------------------------------------------------------------------- #
def _qkv_kernel(x_ref, w_ref, b_ref, out_ref, acc_ref):
    @pl.when(pl.program_id(2) == 0)
    def _():
        acc_ref[...] = jnp.zeros_like(acc_ref)

    acc_ref[...] += jnp.dot(x_ref[...], w_ref[...],
                            preferred_element_type=jnp.float32)

    @pl.when(pl.program_id(2) == pl.num_programs(2) - 1)
    def _():
        out_ref[...] = (acc_ref[...] + b_ref[...]).astype(out_ref.dtype)


def _qkv_projection(x_bf, wqkv_bf, bqkv, row_tile):
    n_pad, d = x_bf.shape
    c_out = wqkv_bf.shape[1]
    # Cap resident weight slabs so production (4096 x 12288) stays VMEM-feasible
    # on v7x (64 MiB) with double buffering; bf16 weights halve the footprint.
    col_tile = _pick_tile(c_out, 1024)
    k_tile = _pick_tile(d, 512)
    return pl.pallas_call(
        _qkv_kernel,
        out_shape=jax.ShapeDtypeStruct((n_pad, c_out), jnp.bfloat16),
        grid=(n_pad // row_tile, c_out // col_tile, d // k_tile),
        in_specs=[
            pl.BlockSpec((row_tile, k_tile), lambda r, c, k: (r, k)),
            pl.BlockSpec((k_tile, col_tile), lambda r, c, k: (k, c)),
            pl.BlockSpec((1, col_tile), lambda r, c, k: (0, c)),
        ],
        out_specs=pl.BlockSpec((row_tile, col_tile), lambda r, c, k: (r, c)),
        scratch_shapes=[pltpu.VMEM((row_tile, col_tile), jnp.float32)],
        compiler_params=pltpu.CompilerParams(
            dimension_semantics=("parallel", "parallel", "arbitrary")),
    )(x_bf, wqkv_bf, bqkv)


# --------------------------------------------------------------------------- #
# Kernel B: block-diagonal (per-group) flash attention with k-tile skipping.
# Grid = (heads, q_tiles, kmax); scalar-prefetched kstart/klast give the window
# of k-tiles each q-tile actually intersects. Writes res1 = ctx + x directly in
# concatenated-heads layout [Np, H*hd].
# --------------------------------------------------------------------------- #
def _segment_attn_kernel(kstart_ref, klast_ref,
                         seg_q_ref, seg_k_ref, q_ref, k_ref, v_ref, x_ref,
                         res1_ref, m_scr, l_scr, acc_scr):
    i = pl.program_id(1)          # q-tile index
    j = pl.program_id(2)          # offset within this q-tile's k-tile window
    klim = klast_ref[i]           # last valid offset (inclusive)

    @pl.when(j == 0)
    def _():
        m_scr[...] = jnp.full(m_scr.shape, -jnp.inf, jnp.float32)
        l_scr[...] = jnp.zeros_like(l_scr)
        acc_scr[...] = jnp.zeros_like(acc_scr)

    @pl.when(j <= klim)
    def _():
        q = q_ref[...]            # [TQ, hd] bf16 (softmax scale folded into wq)
        k = k_ref[...]            # [TK, hd] bf16
        v = v_ref[...]            # [TK, hd] bf16

        # scores [TQ, TK]: contract head_dim of both operands (no transpose).
        s = lax.dot_general(q, k, (((1,), (1,)), ((), ())),
                            preferred_element_type=jnp.float32)

        # Block-diagonal visibility: only keys in the same group as the query.
        mask = seg_q_ref[...] == seg_k_ref[...]                 # [TQ, TK]
        s = s + jnp.where(mask, 0.0, -1e30)                     # additive bias

        m_prev = m_scr[...]
        m_new = jnp.maximum(m_prev, jnp.max(s, axis=-1, keepdims=True))
        alpha = jnp.exp(m_prev - m_new)
        p = jnp.exp(s - m_new)
        # Load-bearing: query rows whose group has no keys in THIS k-tile (e.g.
        # boundary rows on their first visited tile) have m_new == -1e30 and
        # exp(s - m_new) == 1 without this zeroing. Keep the -1e30 constant
        # (not -inf, which would NaN via -inf - -inf).
        p = jnp.where(mask, p, 0.0)
        l_scr[...] = alpha * l_scr[...] + jnp.sum(p, axis=-1, keepdims=True)
        acc_scr[...] = alpha * acc_scr[...] + jnp.dot(
            p.astype(v.dtype), v, preferred_element_type=jnp.float32)
        m_scr[...] = m_new

    @pl.when(j == klim)
    def _():
        # Exact reciprocal: runs once per (head, q-tile); negligible cost.
        ctx = acc_scr[...] / l_scr[...]
        res1_ref[...] = (ctx + x_ref[...]).astype(res1_ref.dtype)   # fuse residual


def _segment_attention(qkv_bf, x_f32, seg_row, seg_col, kstart, klast,
                       num_heads, head_dim, tile, kmax):
    n_pad = x_f32.shape[0]
    hidden = num_heads * head_dim
    nt = n_pad // tile
    nh = num_heads

    def kidx(i, j, ks_ref, kl_ref):
        # clamp so out-of-window steps just re-address the last needed tile
        return ks_ref[i] + jnp.minimum(j, kl_ref[i])

    return pl.pallas_call(
        _segment_attn_kernel,
        out_shape=jax.ShapeDtypeStruct((n_pad, hidden), jnp.float32),
        grid_spec=pltpu.PrefetchScalarGridSpec(
            num_scalar_prefetch=2,
            grid=(nh, nt, kmax),
            in_specs=[
                # segment ids for query rows / key cols
                pl.BlockSpec((tile, 1), lambda h, i, j, ks, kl: (i, 0)),
                pl.BlockSpec((1, tile),
                             lambda h, i, j, ks, kl: (0, kidx(i, j, ks, kl))),
                # Q / K / V read straight from the [Np, 3H] QKV buffer:
                # column block h is Q-head h, nh+h is K-head h, 2nh+h is V-head h.
                pl.BlockSpec((tile, head_dim), lambda h, i, j, ks, kl: (i, h)),
                pl.BlockSpec((tile, head_dim),
                             lambda h, i, j, ks, kl: (kidx(i, j, ks, kl), nh + h)),
                pl.BlockSpec((tile, head_dim),
                             lambda h, i, j, ks, kl: (kidx(i, j, ks, kl), 2 * nh + h)),
                # prod_rep (f32) for the fused res1 = ctx + x
                pl.BlockSpec((tile, head_dim), lambda h, i, j, ks, kl: (i, h)),
            ],
            out_specs=pl.BlockSpec((tile, head_dim),
                                   lambda h, i, j, ks, kl: (i, h)),
            scratch_shapes=[
                pltpu.VMEM((tile, 1), jnp.float32),          # running max
                pltpu.VMEM((tile, 1), jnp.float32),          # running denom
                pltpu.VMEM((tile, head_dim), jnp.float32),   # running numerator
            ]),
        # head and q-tile axes parallel (v7x: 2 TCs split heads x q-tiles);
        # the k-window axis carries the accumulator -> arbitrary.
        compiler_params=pltpu.CompilerParams(
            dimension_semantics=("parallel", "parallel", "arbitrary")),
    )(kstart, klast, seg_row, seg_col, qkv_bf, qkv_bf, qkv_bf, x_f32)


# --------------------------------------------------------------------------- #
# Kernel C: res2 = res1 + res1 @ Wf + bf   (rows x cols x K tiled, bf16 weights)
# --------------------------------------------------------------------------- #
def _fc_residual_kernel(r_mm_ref, wf_ref, r_res_ref, bf_ref, out_ref, acc_ref):
    @pl.when(pl.program_id(2) == 0)
    def _():
        acc_ref[...] = jnp.zeros_like(acc_ref)

    acc_ref[...] += jnp.dot(r_mm_ref[...].astype(wf_ref.dtype), wf_ref[...],
                            preferred_element_type=jnp.float32)

    @pl.when(pl.program_id(2) == pl.num_programs(2) - 1)
    def _():
        out_ref[...] = (acc_ref[...] + r_res_ref[...] + bf_ref[...]
                        ).astype(out_ref.dtype)


def _fc_residual(res1, wf_bf, bf, row_tile):
    n_pad, h = res1.shape
    d_out = wf_bf.shape[1]
    col_tile = _pick_tile(d_out, 1024)
    k_tile = _pick_tile(h, 512)
    return pl.pallas_call(
        _fc_residual_kernel,
        out_shape=jax.ShapeDtypeStruct((n_pad, d_out), jnp.float32),
        grid=(n_pad // row_tile, d_out // col_tile, h // k_tile),
        in_specs=[
            pl.BlockSpec((row_tile, k_tile), lambda r, c, k: (r, k)),    # res1 (matmul)
            pl.BlockSpec((k_tile, col_tile), lambda r, c, k: (k, c)),    # Wf (bf16)
            pl.BlockSpec((row_tile, col_tile), lambda r, c, k: (r, c)),  # res1 (residual)
            pl.BlockSpec((1, col_tile), lambda r, c, k: (0, c)),         # bf
        ],
        out_specs=pl.BlockSpec((row_tile, col_tile), lambda r, c, k: (r, c)),
        scratch_shapes=[pltpu.VMEM((row_tile, col_tile), jnp.float32)],
        compiler_params=pltpu.CompilerParams(
            dimension_semantics=("parallel", "parallel", "arbitrary")),
    )(res1, wf_bf, res1, bf)


# --------------------------------------------------------------------------- #
# Forward wrapper
# --------------------------------------------------------------------------- #
def self_attention_forward(prod_rep, num_rels, params, num_heads):
    """prod_rep: [N, D] f32; num_rels: python list of ints summing to N."""
    n, d = prod_rep.shape
    hidden = params["wq"].shape[1]
    assert hidden % num_heads == 0
    head_dim = hidden // num_heads
    assert d == hidden, "module's residual add requires input_size == hidden_size"
    assert d % 128 == 0 and hidden % 128 == 0
    # TODO(synk): head_dim < 128 would need a head-minor relayout of the QKV
    # buffer; module default (4096/8 -> 512) and this script (256/2 -> 128) are OK.
    assert head_dim % 128 == 0

    # Fold the softmax scale into the Q projection; fuse Q/K/V into one matmul.
    scale = 1.0 / math.sqrt(head_dim)
    wqkv_bf = jnp.concatenate(
        [params["wq"] * scale, params["wk"], params["wv"]], axis=1
    ).astype(jnp.bfloat16)
    bqkv = jnp.concatenate(
        [params["bq"] * scale, params["bk"], params["bv"]], axis=1)      # f32

    # One 128-row pad for the whole batch (lane/sublane friendly); groups are
    # expressed with segment ids, so no per-group padding and no unpad/concat.
    tile = 128     # matches v5e MXU / lane width; raise to 256 on v6e (review)
    n_pad = _round_up(max(n, tile), tile)
    x = prod_rep if n_pad == n else jnp.pad(prod_rep, ((0, n_pad - n), (0, 0)))
    x_bf = x.astype(jnp.bfloat16)

    # Host-side (static) segment ids + per-q-tile k-tile windows. Groups are
    # contiguous, so each q-tile only intersects a contiguous range of k-tiles.
    nt = n_pad // tile
    rels = np.asarray(num_rels, np.int64)
    offs = np.concatenate([np.zeros(1, np.int64), np.cumsum(rels)])
    seg = np.full(n_pad, -1, np.int32)
    seg[:n] = np.repeat(np.arange(len(num_rels), dtype=np.int32), rels)
    grp_start = np.full(n_pad, n, np.int64)       # padded rows form a trailing group
    grp_end = np.full(n_pad, n_pad, np.int64)
    for g in range(len(num_rels)):
        grp_start[offs[g]:offs[g + 1]] = offs[g]
        grp_end[offs[g]:offs[g + 1]] = offs[g + 1]
    kstart = np.empty(nt, np.int32)
    klast = np.empty(nt, np.int32)
    for i in range(nt):
        lo = int(grp_start[i * tile:(i + 1) * tile].min())
        hi = int(grp_end[i * tile:(i + 1) * tile].max())
        ks = lo // tile
        kstart[i] = ks
        klast[i] = (hi - 1) // tile - ks
    kmax = int(klast.max()) + 1

    seg_row = jnp.asarray(seg.reshape(n_pad, 1))
    seg_col = jnp.asarray(seg.reshape(1, n_pad))
    kstart_j = jnp.asarray(kstart)
    klast_j = jnp.asarray(klast)

    # ---- Kernel A: fused QKV projection over all rows ----
    qkv = _qkv_projection(x_bf, wqkv_bf, bqkv, tile)        # [Np, 3H] bf16

    # ---- Kernel B: block-diagonal flash attention + fused res1 = ctx + x ----
    res1 = _segment_attention(qkv, x, seg_row, seg_col, kstart_j, klast_j,
                              num_heads, head_dim, tile, kmax)   # [Np, H] f32

    # ---- Kernel C: res2 = res1 + fc(res1) over all rows ----
    out = _fc_residual(res1, params["wf"].astype(jnp.bfloat16), params["bf"], tile)

    return [out[:n], num_rels]


# --------------------------------------------------------------------------- #
# Pure-JAX reference (matches the PyTorch module exactly, f32 throughout)
# --------------------------------------------------------------------------- #
def reference_forward(prod_rep, num_rels, params, num_heads):
    hidden = params["wq"].shape[1]
    head_dim = hidden // num_heads
    outs, off = [], 0
    for n in num_rels:
        x = prod_rep[off:off + n]
        off += n
        q = x @ params["wq"] + params["bq"][0]
        k = x @ params["wk"] + params["bk"][0]
        v = x @ params["wv"] + params["bv"][0]
        qh = q.reshape(n, num_heads, head_dim).transpose(1, 0, 2)
        kh = k.reshape(n, num_heads, head_dim).transpose(1, 0, 2)
        vh = v.reshape(n, num_heads, head_dim).transpose(1, 0, 2)
        s = jnp.einsum('hqd,hkd->hqk', qh, kh) / math.sqrt(head_dim)
        p = jax.nn.softmax(s, axis=-1)
        ctx = jnp.einsum('hqk,hkd->hqd', p, vh).transpose(1, 0, 2).reshape(n, hidden)
        outs.append(ctx)
    enc = jnp.concatenate(outs, axis=0)
    res1 = enc + prod_rep
    res2 = res1 + res1 @ params["wf"] + params["bf"][0]
    return res2


def init_params(key, input_size, hidden_size):
    """Deterministic nn.Linear-style init: U(-1/sqrt(fan_in), 1/sqrt(fan_in))."""
    ks = jax.random.split(key, 8)

    def lin(kw, kb, fan_in, fan_out):
        bound = 1.0 / math.sqrt(fan_in)
        w = jax.random.uniform(kw, (fan_in, fan_out), jnp.float32, -bound, bound)
        b = jax.random.uniform(kb, (1, fan_out), jnp.float32, -bound, bound)
        return w, b

    wq, bq = lin(ks[0], ks[1], input_size, hidden_size)
    wk, bk = lin(ks[2], ks[3], input_size, hidden_size)
    wv, bv = lin(ks[4], ks[5], input_size, hidden_size)
    wf, bf = lin(ks[6], ks[7], hidden_size, input_size)
    return dict(wq=wq, bq=bq, wk=wk, bk=bk, wv=wv, bv=bv, wf=wf, bf=bf)


if __name__ == "__main__":
    # Small, TPU-friendly sizes (module defaults are 4096/4096/8 heads).
    NUM_HEADS = 2
    INPUT_SIZE = 256
    HIDDEN_SIZE = 256
    # N = 250: group 1 straddles the 128-row tile boundary and 6 padded rows are
    # appended, exercising k-tile skipping, partial masks and padded segments.
    NUM_RELS = [100, 60, 90]
    N = sum(NUM_RELS)

    key = jax.random.PRNGKey(0)
    k_x, k_p = jax.random.split(key)
    prod_rep = jax.random.normal(k_x, (N, INPUT_SIZE), jnp.float32)
    params = init_params(k_p, INPUT_SIZE, HIDDEN_SIZE)

    res2, num_rels_out = self_attention_forward(prod_rep, NUM_RELS, params, NUM_HEADS)
    res2 = jax.block_until_ready(res2)

    ref = reference_forward(prod_rep, NUM_RELS, params, NUM_HEADS)
    assert res2.shape == ref.shape == (N, INPUT_SIZE)
    max_err = float(jnp.max(jnp.abs(res2 - ref)))
    # bf16 MXU operands (per perf review) loosen the match vs the f32 reference.
    assert jnp.allclose(res2, ref, rtol=3e-2, atol=3e-2), \
        f"mismatch vs JAX reference (max |err| = {max_err})"
    print("KERNEL_OK")
</pallas_src>

<mosaic_0001>
module attributes {stable_mosaic.version = 11 : i64} {
  func.func @_qkv_kernel(%arg0: i32, %arg1: i32, %arg2: i32, %arg3: memref<128x256xbf16, #tpu.memory_space<vmem>>, %arg4: memref<256x768xbf16, #tpu.memory_space<vmem>>, %arg5: memref<1x768xf32, #tpu.memory_space<vmem>>, %arg6: memref<128x768xbf16, #tpu.memory_space<vmem>>, %arg7: memref<128x768xf32, #tpu.memory_space<vmem>>) attributes {dimension_semantics = [#tpu.dimension_semantics<parallel>, #tpu.dimension_semantics<parallel>, #tpu.dimension_semantics<arbitrary>], iteration_bounds = array<i64: 2, 1, 1>, scalar_prefetch = 0 : i64, scratch_operands = 1 : i64, tpu.core_type = #tpu.core_type<tc>, window_params = [{transform_indices = @transform_0, window_bounds = array<i64: 128, 256>}, {transform_indices = @transform_1, window_bounds = array<i64: 256, 768>}, {transform_indices = @transform_2, window_bounds = array<i64: 1, 768>}, {transform_indices = @transform_3, window_bounds = array<i64: 128, 768>}]} {
    %c0_i32 = arith.constant 0 : i32
    %0 = arith.cmpi eq, %arg2, %c0_i32 : i32
    %1 = arith.extui %0 : i1 to i32
    %c0_i32_0 = arith.constant 0 : i32
    %2 = arith.cmpi ne, %1, %c0_i32_0 : i32
    scf.if %2 {
      %cst_10 = arith.constant 0.000000e+00 : f32
      %12 = vector.broadcast %cst_10 : f32 to vector<128x768xf32>
      %c0_11 = arith.constant 0 : index
      %c0_12 = arith.constant 0 : index
      %13 = vector.load %arg7[%c0_11, %c0_12] : memref<128x768xf32, #tpu.memory_space<vmem>>, vector<128x768xf32>
      tpu.vector_store %arg7[%c0_11, %c0_12], %12 {strides = array<i32>} : memref<128x768xf32, #tpu.memory_space<vmem>>, vector<128x768xf32>,
    } else {
    }
    %c0 = arith.constant 0 : index
    %c0_1 = arith.constant 0 : index
    %3 = vector.load %arg7[%c0, %c0_1] : memref<128x768xf32, #tpu.memory_space<vmem>>, vector<128x768xf32>
    %c0_2 = arith.constant 0 : index
    %c0_3 = arith.constant 0 : index
    %4 = vector.load %arg3[%c0_2, %c0_3] : memref<128x256xbf16, #tpu.memory_space<vmem>>, vector<128x256xbf16>
    %c0_4 = arith.constant 0 : index
    %c0_5 = arith.constant 0 : index
    %5 = vector.load %arg4[%c0_4, %c0_5] : memref<256x768xbf16, #tpu.memory_space<vmem>>, vector<256x768xbf16>
    %cst = arith.constant dense<0.000000e+00> : vector<128x768xf32>
    %6 = tpu.matmul %4, %5, %cst {dimension_numbers = #tpu.dot_dimension_numbers<[1], [0], [0], [1], [0, 0, 1, 1], [], []>} : vector<128x256xbf16>, vector<256x768xbf16>, vector<128x768xf32> -> vector<128x768xf32>
    %7 = arith.addf %3, %6 : vector<128x768xf32>
    %c0_6 = arith.constant 0 : index
    %c0_7 = arith.constant 0 : index
    %8 = vector.load %arg7[%c0_6, %c0_7] : memref<128x768xf32, #tpu.memory_space<vmem>>, vector<128x768xf32>
    tpu.vector_store %arg7[%c0_6, %c0_7], %7 {strides = array<i32>} : memref<128x768xf32, #tpu.memory_space<vmem>>, vector<128x768xf32>,
    %c0_i32_8 = arith.constant 0 : i32
    %9 = arith.cmpi eq, %arg2, %c0_i32_8 : i32
    %10 = arith.extui %9 : i1 to i32
    %c0_i32_9 = arith.constant 0 : i32
    %11 = arith.cmpi ne, %10, %c0_i32_9 : i32
    scf.if %11 {
      %c0_10 = arith.constant 0 : index
      %c0_11 = arith.constant 0 : index
      %12 = vector.load %arg7[%c0_10, %c0_11] : memref<128x768xf32, #tpu.memory_space<vmem>>, vector<128x768xf32>
      %c0_12 = arith.constant 0 : index
      %c0_13 = arith.constant 0 : index
      %13 = vector.load %arg5[%c0_12, %c0_13] : memref<1x768xf32, #tpu.memory_space<vmem>>, vector<1x768xf32>
      %14 = vector.broadcast %13 : vector<1x768xf32> to vector<128x768xf32>
      %15 = arith.addf %12, %14 : vector<128x768xf32>
      %16 = arith.truncf %15 : vector<128x768xf32> to vector<128x768xbf16>
      %c0_14 = arith.constant 0 : index
      %c0_15 = arith.constant 0 : index
      %17 = vector.load %arg6[%c0_14, %c0_15] : memref<128x768xbf16, #tpu.memory_space<vmem>>, vector<128x768xbf16>
      tpu.vector_store %arg6[%c0_14, %c0_15], %16 {strides = array<i32>} : memref<128x768xbf16, #tpu.memory_space<vmem>>, vector<128x768xbf16>,
    } else {
    }
    return
  }
  func.func @transform_0(%arg0: i32, %arg1: i32, %arg2: i32) -> (i32, i32) {
    %c0_i32 = arith.constant 0 : i32
    return %arg0, %arg2 : i32, i32
  }
  func.func @transform_1(%arg0: i32, %arg1: i32, %arg2: i32) -> (i32, i32) {
    %c0_i32 = arith.constant 0 : i32
    return %arg2, %arg1 : i32, i32
  }
  func.func @transform_2(%arg0: i32, %arg1: i32, %arg2: i32) -> (i32, i32) {
    %c0_i32 = arith.constant 0 : i32
    %c0_i32_0 = arith.constant 0 : i32
    return %c0_i32, %arg1 : i32, i32
  }
  func.func @transform_3(%arg0: i32, %arg1: i32, %arg2: i32) -> (i32, i32) {
    %c0_i32 = arith.constant 0 : i32
    return %arg0, %arg1 : i32, i32
  }
}

</mosaic_0001>

<llo_original>
// kernel: tpu_custom_call.1
$region0: #{tpu_custom_call.1}
  #allocation0 [shape = 'u32[]', space=smem, size = 0x4, offset = 0x4, fixed_abs, tag = 'smem constant byte address 0x4 - core index']
  #allocation1 [shape = 'u32[72,128]{1,0:T(1,128)}', space=vmem, size = 0x9000, scoped, tag = 'internal scratch']
  #allocation2 [shape = 'f32[128,768]{1,0:T(8,128)}', space=vmem, size = 0x60000, scoped, tag = 'scratch operand']
  %s0 = inlined_call_operand.hbm [shape: bf16[256,256], index: 0, kind: input, shape index: {}]
  %s1 = inlined_call_operand.hbm [shape: bf16[256,768], index: 1, kind: input, shape index: {}]
  %s2 = inlined_call_operand.hbm [shape: f32[1,768], index: 2, kind: input, shape index: {}]
  %s3 = inlined_call_operand.hbm [shape: bf16[256,768], index: 3, kind: output, shape index: {}]
  %s4 = sld [smem:[#allocation0]]
  $region65: #{tpu_custom_call.1} parent=0
    _
  %s6 = ssub.s32 1, %s4
  %s7 = scalar_select 0, %s6, %s4
  $region1: #{tpu_custom_call.1} parent=0
    #allocation3 [shape = 'u8[131072]{0}', space=vmem, size = 0x20000, scoped, tag = 'input window, operand 0']
    #allocation4 [shape = 's32[2]{0}', space=sflag, size = 0x8, scoped, tag = 'scoped memory for tpu_custom_call.1']
    #allocation5 [shape = 's32[2]{0}', space=sflag, size = 0x8, scoped, tag = 'scoped memory for tpu_custom_call.1']
    #allocation6 [shape = 'u8[393216]{0}', space=vmem, size = 0x60000, scoped, tag = 'input window, operand 1, single buffered']
    #allocation7 [shape = 's32[1]{0}', space=sflag, size = 0x4, scoped, tag = 'scoped memory for tpu_custom_call.1']
    #allocation8 [shape = 'u8[3072]{0}', space=vmem, size = 0xc00, scoped, tag = 'input window, operand 2, single buffered']
    #allocation9 [shape = 'u8[393216]{0}', space=vmem, size = 0x60000, scoped, tag = 'output window, operand 0']
    %8 = vsyncpa [#allocation4], 0
    %s9 = scalar_lea.sflag [#allocation4], 1
    %10 = vsyncpa %s9, 0
    %11 = vsyncpa [#allocation7], 0
    %12 = vsyncpa [#allocation5], 0
    %s13 = scalar_lea.sflag [#allocation5], 1
    %14 = vsyncpa %s13, 0
    loop: start=0, step=1, limit=4
    $region2: #{tpu_custom_call.1} parent=1 // loop_pre_header
      _
    $region3: #{tpu_custom_call.1} parent=1 // loop_header
      %s16 = sphi 0, %s20
      %p17 = scmp.ge.s32.totalorder %s16, 4
      %s23 = sphi 0, %s42
      %s24 = sphi 0, %s38
      %s25 = sphi 0, %s34
      %s26 = sphi 0, %s23
      %s27 = sphi 0, %s24
      %s28 = sphi 0, %s25
      %s29 = sphi 0, %s26
      %s30 = sphi 0, %s27
      %s31 = sphi 0, %s28
      %s47 = sphi 0, %s49
      %s50 = sphi 0, %s47
      %s51 = sphi 0, %s50
      %s67 = sphi 0, %s51
      %s75 = sphi 0, %s77
      %s78 = sphi 0, %s75
      %s79 = sphi 0, %s78
      %s95 = sphi 0, %s79
      %s101 = sphi 0, %s103
      %s104 = sphi 0, %s101
      %s105 = sphi 0, %s104
      %s121 = sphi 0, %s105
      %s129 = sphi 0, %s131
      %s132 = sphi 0, %s129
      %s133 = sphi 0, %s132
      %s149 = sphi 0, %s133
    $region4: #{tpu_custom_call.1} parent=1 // loop_header_branch
      %19 = sbr.rel (%p17) target = $region8
    $region5: #{tpu_custom_call.1} parent=1 // loop_body
      %s21 = ssub.s32 %s16, 1
      %s22 = ssub.s32 %s16, 2
      %s32 = sadd.s32 1, %s25
      %p33 = scmp.ge.s32.totalorder %s32, 1
      %s34 = scalar_select %p33, 0, %s32
      %s35 = sadd.s32 1, %s24
      %s36 = scalar_select %p33, %s35, %s24
      %p37 = scmp.ge.s32.totalorder %s36, 1
      %s38 = scalar_select %p37, 0, %s36
      %s39 = sadd.s32 1, %s23
      %s40 = scalar_select %p37, %s39, %s23
      %p41 = scmp.ge.s32.totalorder %s40, 2
      %s42 = scalar_select %p41, 0, %s40
      %s43 = ssub.s32 %s23, %s42
      %s44 = ssub.s32 %s25, %s34
      %s45 = sor.u32 %s43, %s44
      %p46 = scmp.eq.s32.totalorder %s45, 0
      %s48 = sadd.s32 %s47, 1
      %s49 = scalar_select %p46, %s47, %s48
      %p52 = pneg %p46
      %p53 = scmp.eq.s32.totalorder %s16, 1
      %p54 = por %p52, %p53
      %p55 = scmp.ne.s32.totalorder %s47, %s50
      %p56 = scmp.eq.s32.totalorder %s16, 0
      %p57 = por %p55, %p56
      %p58 = scmp.ne.s32.totalorder %s47, %s50
      %p59 = scmp.eq.s32.totalorder %s21, 1
      %p60 = por %p58, %p59
      %p61 = scmp.ne.s32.totalorder %s50, %s51
      %p62 = scmp.eq.s32.totalorder %s21, 0
      %p63 = por %p61, %p62
      %p64 = scmp.ne.s32.totalorder %s50, %s51
      %p65 = scmp.eq.s32.totalorder %s22, 1
      %p66 = por %p64, %p65
      %p68 = scmp.ne.s32.totalorder %s51, %s67
      %p69 = scmp.eq.s32.totalorder %s22, 0
      %p70 = por %p68, %p69
      %s71 = ssub.s32 %s25, %s34
      %s72 = ssub.s32 %s24, %s38
      %s73 = sor.u32 %s71, %s72
      %p74 = scmp.eq.s32.totalorder %s73, 0
      %s76 = sadd.s32 %s75, 1
      %s77 = scalar_select %p74, %s75, %s76
      %p80 = pneg %p74
      %p81 = scmp.eq.s32.totalorder %s16, 1
      %p82 = por %p80, %p81
      %p83 = scmp.ne.s32.totalorder %s75, %s78
      %p84 = scmp.eq.s32.totalorder %s16, 0
      %p85 = por %p83, %p84
      %p86 = scmp.ne.s32.totalorder %s75, %s78
      %p87 = scmp.eq.s32.totalorder %s21, 1
      %p88 = por %p86, %p87
      %p89 = scmp.ne.s32.totalorder %s78, %s79
      %p90 = scmp.eq.s32.totalorder %s21, 0
      %p91 = por %p89, %p90
      %p92 = scmp.ne.s32.totalorder %s78, %s79
      %p93 = scmp.eq.s32.totalorder %s22, 1
      %p94 = por %p92, %p93
      %p96 = scmp.ne.s32.totalorder %s79, %s95
      %p97 = scmp.eq.s32.totalorder %s22, 0
      %p98 = por %p96, %p97
      %s99 = ssub.s32 %s24, %s38
      %p100 = scmp.eq.s32.totalorder %s99, 0
      %s102 = sadd.s32 %s101, 1
      %s103 = scalar_select %p100, %s101, %s102
      %p106 = pneg %p100
      %p107 = scmp.eq.s32.totalorder %s16, 1
      %p108 = por %p106, %p107
      %p109 = scmp.ne.s32.totalorder %s101, %s104
      %p110 = scmp.eq.s32.totalorder %s16, 0
      %p111 = por %p109, %p110
      %p112 = scmp.ne.s32.totalorder %s101, %s104
      %p113 = scmp.eq.s32.totalorder %s21, 1
      %p114 = por %p112, %p113
      %p115 = scmp.ne.s32.totalorder %s104, %s105
      %p116 = scmp.eq.s32.totalorder %s21, 0
      %p117 = por %p115, %p116
      %p118 = scmp.ne.s32.totalorder %s104, %s105
      %p119 = scmp.eq.s32.totalorder %s22, 1
      %p120 = por %p118, %p119
      %p122 = scmp.ne.s32.totalorder %s105, %s121
      %p123 = scmp.eq.s32.totalorder %s22, 0
      %p124 = por %p122, %p123
      %s125 = ssub.s32 %s23, %s42
      %s126 = ssub.s32 %s24, %s38
      %s127 = sor.u32 %s125, %s126
      %p128 = scmp.eq.s32.totalorder %s127, 0
      %s130 = sadd.s32 %s129, 1
      %s131 = scalar_select %p128, %s129, %s130
      %p134 = pneg %p128
      %p135 = scmp.eq.s32.totalorder %s16, 1
      %p136 = por %p134, %p135
      %p137 = scmp.ne.s32.totalorder %s129, %s132
      %p138 = scmp.eq.s32.totalorder %s16, 0
      %p139 = por %p137, %p138
      %p140 = scmp.ne.s32.totalorder %s129, %s132
      %p141 = scmp.eq.s32.totalorder %s21, 1
      %p142 = por %p140, %p141
      %p143 = scmp.ne.s32.totalorder %s132, %s133
      %p144 = scmp.eq.s32.totalorder %s21, 0
      %p145 = por %p143, %p144
      %p146 = scmp.ne.s32.totalorder %s132, %s133
      %p147 = scmp.eq.s32.totalorder %s22, 1
      %p148 = por %p146, %p147
      %p150 = scmp.ne.s32.totalorder %s133, %s149
      %p151 = scmp.eq.s32.totalorder %s22, 0
      %p152 = por %p150, %p151
      %p153 = scmp.le.s32.totalorder 1, %s16
      %p154 = scmp.lt.s32.totalorder %s16, 3
      %p155 = pnand %p153, %p154
      %p156 = pneg %p155
      // Predicated region
      $region9: #{tpu_custom_call.1} parent=5 // pred_check
        _
      $region10: #{tpu_custom_call.1} parent=5 // pred_check_branch
        %158 = sbr.rel (%p155) target = $region12
      $region11: #{tpu_custom_call.1} parent=5 // pred_region
        %s159 = ssub.s32 %s16, 1
        // Predicated region
        $region13: #{tpu_custom_call.1} parent=11 // pred_check
          %p160 = pneg %p91
        $region14: #{tpu_custom_call.1} parent=11 // pred_check_branch
          %162 = sbr.rel (%p160) target = $region16
        $region15: #{tpu_custom_call.1} parent=11 // pred_region
          %s163 = smul.u32 32, %s28
          %s164 = smul.u32 6, %s27
          %166 = vsyncadd [#allocation7], 0
          %s167 = smul.addr %s163, 6
          %s168 = sadd.s32 %s164, %s167
          %s169 = smul.addr %s168, 4
          %s170 = scalar_lea.hbm %s1, %s169
          %s171 = sshll.u32 %s170, 4
          %s172 = int_to_ptr.hbm [resolvable:$true] %s171
          %s173 = sshll.u32 [#allocation6], 4
          %s174 = int_to_ptr.vmem [resolvable:$true] %s173
          %179 = dma.hbm_to_vmem [thread:$0]  %s172, 12288, %s174, [#allocation7], 384, 384, 24
        $region16: #{tpu_custom_call.1} parent=11 // pred_fallthru
          _
        // Predicated region
        $region17: #{tpu_custom_call.1} parent=11 // pred_check
          %p180 = pneg %p117
        $region18: #{tpu_custom_call.1} parent=11 // pred_check_branch
          %182 = sbr.rel (%p180) target = $region20
        $region19: #{tpu_custom_call.1} parent=11 // pred_region
          %s183 = smul.u32 6, %s27
          %185 = vsyncadd [#allocation7], 0
          %s186 = scalar_lea.hbm %s2, %s183
          %s188 = sshll.u32 %s186, 4
          %s189 = int_to_ptr.hbm [resolvable:$true] %s188
          %s190 = sshll.u32 [#allocation8], 4
          %s191 = int_to_ptr.vmem [resolvable:$true] %s190
          %193 = dma.hbm_to_vmem [thread:$0]  %s189, 96, %s191, [#allocation7]
        $region20: #{tpu_custom_call.1} parent=11 // pred_fallthru
          _
      $region12: #{tpu_custom_call.1} parent=5 // pred_fallthru
        _
      %p194 = scmp.lt.s32.totalorder %s16, 2
      // Predicated region
      $region21: #{tpu_custom_call.1} parent=5 // pred_check
        %p195 = pneg %p194
      $region22: #{tpu_custom_call.1} parent=5 // pred_check_branch
        %197 = sbr.rel (%p195) target = $region24
      $region23: #{tpu_custom_call.1} parent=5 // pred_region
        // Predicated region
        $region25: #{tpu_custom_call.1} parent=23 // pred_check
          %p198 = pneg %p57
        $region26: #{tpu_custom_call.1} parent=23 // pred_check_branch
          %200 = sbr.rel (%p198) target = $region28
        $region27: #{tpu_custom_call.1} parent=23 // pred_region
          %s201 = sand.u32 %s47, 1
          %s202 = scalar_lea.sflag [#allocation4], %s201
          %s203 = sand.u32 %s47, 1
          %s204 = smul.addr %s203, 128
          %s205 = scalar_lea.vmem [#allocation3], %s204
          %s206 = smul.u32 16, %s23
          %s207 = smul.u32 2, %s25
          %209 = vsyncadd %s202, 0
          %s210 = smul.addr %s206, 2
          %s211 = sadd.s32 %s207, %s210
          %s212 = smul.addr %s211, 4
          %s213 = scalar_lea.hbm %s0, %s212
          %s214 = sshll.u32 %s213, 4
          %s215 = int_to_ptr.hbm [resolvable:$true] %s214
          %s216 = sshll.u32 %s205, 4
          %s217 = int_to_ptr.vmem [resolvable:$true] %s216
          %222 = dma.hbm_to_vmem [thread:$0]  %s215, 2048, %s217, %s202, 128, 128, 8
        $region28: #{tpu_custom_call.1} parent=23 // pred_fallthru
          _
      $region24: #{tpu_custom_call.1} parent=5 // pred_fallthru
        _
      %p223 = scmp.le.s32.totalorder 1, %s16
      %p224 = scmp.lt.s32.totalorder %s16, 3
      %p225 = pnand %p223, %p224
      %p226 = pneg %p225
      // Predicated region
      $region29: #{tpu_custom_call.1} parent=5 // pred_check
        _
      $region30: #{tpu_custom_call.1} parent=5 // pred_check_branch
        %228 = sbr.rel (%p225) target = $region32
      $region31: #{tpu_custom_call.1} parent=5 // pred_region
        %s229 = ssub.s32 %s16, 1
        %s230 = sand.u32 %s50, 1
        %s231 = scalar_lea.sflag [#allocation4], %s230
        %s232 = sand.u32 %s50, 1
        %s233 = smul.addr %s232, 128
        %s234 = scalar_lea.vmem [#allocation3], %s233
        // Predicated region
        $region33: #{tpu_custom_call.1} parent=31 // pred_check
          %p235 = pneg %p63
        $region34: #{tpu_custom_call.1} parent=31 // pred_check_branch
          %237 = sbr.rel (%p235) target = $region36
        $region35: #{tpu_custom_call.1} parent=31 // pred_region
          %239 = dma.done %s231, 2048
        $region36: #{tpu_custom_call.1} parent=31 // pred_fallthru
          _
        // Predicated region
        $region37: #{tpu_custom_call.1} parent=31 // pred_check
          %p240 = pneg %p91
        $region38: #{tpu_custom_call.1} parent=31 // pred_check_branch
          %242 = sbr.rel (%p240) target = $region40
        $region39: #{tpu_custom_call.1} parent=31 // pred_region
          %244 = dma.done [#allocation7], 12288
        $region40: #{tpu_custom_call.1} parent=31 // pred_fallthru
          _
        // Predicated region
        $region41: #{tpu_custom_call.1} parent=31 // pred_check
          %p245 = pneg %p117
        $region42: #{tpu_custom_call.1} parent=31 // pred_check_branch
          %247 = sbr.rel (%p245) target = $region44
        $region43: #{tpu_custom_call.1} parent=31 // pred_region
          %249 = dma.done [#allocation7], 96
        $region44: #{tpu_custom_call.1} parent=31 // pred_fallthru
          _
        %s250 = sand.u32 %s50, 1
        %s251 = scalar_lea.sflag [#allocation4], %s250
        %s252 = sand.u32 %s50, 1
        %s253 = smul.addr %s252, 128
        %s254 = scalar_lea.vmem [#allocation3], %s253
        %p255 = pneg %p63
        %p256 = pneg %p60
        %p257 = pneg %p91
        %p258 = pneg %p88
        %p259 = pneg %p117
        %p260 = pneg %p114
        %p261 = pneg %p145
        %p262 = pneg %p142
        %s263 = sand.u32 %s132, 1
        %s264 = scalar_lea.sflag [#allocation5], %s263
        %s265 = sand.u32 %s132, 1
        %s266 = smul.addr %s265, 384
        %s267 = scalar_lea.vmem [#allocation9], %s266
        %s268 = smul.u32 16, %s26
        %s269 = smul.u32 2, %s28
        %s270 = smul.u32 32, %s28
        %s271 = smul.u32 6, %s27
        %s272 = smul.u32 6, %s27
        %s273 = smul.u32 16, %s26
        %s274 = smul.u32 6, %s27
        %p275 = scmp.eq.s32.totalorder %s28, 0
        // Predicated region
        $region45: #{tpu_custom_call.1} parent=31 // pred_check
          %p276 = pneg %p275
        $region46: #{tpu_custom_call.1} parent=31 // pred_check_branch
          %278 = sbr.rel (%p276) target = $region48
        $region47: #{tpu_custom_call.1} parent=31 // pred_region
          %279 = vst [vmem:[#allocation2] sm:$0xff] 0.0
          %280 = vst [vmem:[#allocation2 + $0x8] sm:$0xff] 0.0
          %281 = vst [vmem:[#allocation2 + $0x10] sm:$0xff] 0.0
          %282 = vst [vmem:[#allocation2 + $0x18] sm:$0xff] 0.0
          %283 = vst [vmem:[#allocation2 + $0x20] sm:$0xff] 0.0
          %284 = vst [vmem:[#allocation2 + $0x28] sm:$0xff] 0.0
          %285 = vst [vmem:[#allocation2 + $0x30] sm:$0xff] 0.0
          %286 = vst [vmem:[#allocation2 + $0x38] sm:$0xff] 0.0
          %287 = vst [vmem:[#allocation2 + $0x40] sm:$0xff] 0.0
          %288 = vst [vmem:[#allocation2 + $0x48] sm:$0xff] 0.0
          %289 = vst [vmem:[#allocation2 + $0x50] sm:$0xff] 0.0
          %290 = vst [vmem:[#allocation2 + $0x58] sm:$0xff] 0.0
          %291 = vst [vmem:[#allocation2 + $0x60] sm:$0xff] 0.0
          %292 = vst [vmem:[#allocation2 + $0x68] sm:$0xff] 0.0
          %293 = vst [vmem:[#allocation2 + $0x70] sm:$0xff] 0.0
          %294 = vst [vmem:[#allocation2 + $0x78] sm:$0xff] 0.0
          %295 = vst [vmem:[#allocation2 + $0x80] sm:$0xff] 0.0
          %296 = vst [vmem:[#allocation2 + $0x88] sm:$0xff] 0.0
          %297 = vst [vmem:[#allocation2 + $0x90] sm:$0xff] 0.0
          %298 = vst [vmem:[#allocation2 + $0x98] sm:$0xff] 0.0
          %299 = vst [vmem:[#allocation2 + $0xa0] sm:$0xff] 0.0
          %300 = vst [vmem:[#allocation2 + $0xa8] sm:$0xff] 0.0
          %301 = vst [vmem:[#allocation2 + $0xb0] sm:$0xff] 0.0
          %302 = vst [vmem:[#allocation2 + $0xb8] sm:$0xff] 0.0
          %303 = vst [vmem:[#allocation2 + $0xc0] sm:$0xff] 0.0
          %304 = vst [vmem:[#allocation2 + $0xc8] sm:$0xff] 0.0
          %305 = vst [vmem:[#allocation2 + $0xd0] sm:$0xff] 0.0
          %306 = vst [vmem:[#allocation2 + $0xd8] sm:$0xff] 0.0
          %307 = vst [vmem:[#allocation2 + $0xe0] sm:$0xff] 0.0
          %308 = vst [vmem:[#allocation2 + $0xe8] sm:$0xff] 0.0
          %309 = vst [vmem:[#allocation2 + $0xf0] sm:$0xff] 0.0
          %310 = vst [vmem:[#allocation2 + $0xf8] sm:$0xff] 0.0
          %311 = vst [vmem:[#allocation2 + $0x100] sm:$0xff] 0.0
          %312 = vst [vmem:[#allocation2 + $0x108] sm:$0xff] 0.0
          %313 = vst [vmem:[#allocation2 + $0x110] sm:$0xff] 0.0
          %314 = vst [vmem:[#allocation2 + $0x118] sm:$0xff] 0.0
          %315 = vst [vmem:[#allocation2 + $0x120] sm:$0xff] 0.0
          %316 = vst [vmem:[#allocation2 + $0x128] sm:$0xff] 0.0
          %317 = vst [vmem:[#allocation2 + $0x130] sm:$0xff] 0.0
          %318 = vst [vmem:[#allocation2 + $0x138] sm:$0xff] 0.0
          %319 = vst [vmem:[#allocation2 + $0x140] sm:$0xff] 0.0
          %320 = vst [vmem:[#allocation2 + $0x148] sm:$0xff] 0.0
          %321 = vst [vmem:[#allocation2 + $0x150] sm:$0xff] 0.0
          %322 = vst [vmem:[#allocation2 + $0x158] sm:$0xff] 0.0
          %323 = vst [vmem:[#allocation2 + $0x160] sm:$0xff] 0.0
          %324 = vst [vmem:[#allocation2 + $0x168] sm:$0xff] 0.0
          %325 = vst [vmem:[#allocation2 + $0x170] sm:$0xff] 0.0
          %326 = vst [vmem:[#allocation2 + $0x178] sm:$0xff] 0.0
          %327 = vst [vmem:[#allocation2 + $0x180] sm:$0xff] 0.0
          %328 = vst [vmem:[#allocation2 + $0x188] sm:$0xff] 0.0
          %329 = vst [vmem:[#allocation2 + $0x190] sm:$0xff] 0.0
          %330 = vst [vmem:[#allocation2 + $0x198] sm:$0xff] 0.0
          %331 = vst [vmem:[#allocation2 + $0x1a0] sm:$0xff] 0.0
          %332 = vst [vmem:[#allocation2 + $0x1a8] sm:$0xff] 0.0
          %333 = vst [vmem:[#allocation2 + $0x1b0] sm:$0xff] 0.0
          %334 = vst [vmem:[#allocation2 + $0x1b8] sm:$0xff] 0.0
          %335 = vst [vmem:[#allocation2 + $0x1c0] sm:$0xff] 0.0
          %336 = vst [vmem:[#allocation2 + $0x1c8] sm:$0xff] 0.0
          %337 = vst [vmem:[#allocation2 + $0x1d0] sm:$0xff] 0.0
          %338 = vst [vmem:[#allocation2 + $0x1d8] sm:$0xff] 0.0
          %339 = vst [vmem:[#allocation2 + $0x1e0] sm:$0xff] 0.0
          %340 = vst [vmem:[#allocation2 + $0x1e8] sm:$0xff] 0.0
          %341 = vst [vmem:[#allocation2 + $0x1f0] sm:$0xff] 0.0
          %342 = vst [vmem:[#allocation2 + $0x1f8] sm:$0xff] 0.0
          %343 = vst [vmem:[#allocation2 + $0x200] sm:$0xff] 0.0
          %344 = vst [vmem:[#allocation2 + $0x208] sm:$0xff] 0.0
          %345 = vst [vmem:[#allocation2 + $0x210] sm:$0xff] 0.0
          %346 = vst [vmem:[#allocation2 + $0x218] sm:$0xff] 0.0
          %347 = vst [vmem:[#allocation2 + $0x220] sm:$0xff] 0.0
          %348 = vst [vmem:[#allocation2 + $0x228] sm:$0xff] 0.0
          %349 = vst [vmem:[#allocation2 + $0x230] sm:$0xff] 0.0
          %350 = vst [vmem:[#allocation2 + $0x238] sm:$0xff] 0.0
          %351 = vst [vmem:[#allocation2 + $0x240] sm:$0xff] 0.0
          %352 = vst [vmem:[#allocation2 + $0x248] sm:$0xff] 0.0
          %353 = vst [vmem:[#allocation2 + $0x250] sm:$0xff] 0.0
          %354 = vst [vmem:[#allocation2 + $0x258] sm:$0xff] 0.0
          %355 = vst [vmem:[#allocation2 + $0x260] sm:$0xff] 0.0
          %356 = vst [vmem:[#allocation2 + $0x268] sm:$0xff] 0.0
          %357 = vst [vmem:[#allocation2 + $0x270] sm:$0xff] 0.0
          %358 = vst [vmem:[#allocation2 + $0x278] sm:$0xff] 0.0
          %359 = vst [vmem:[#allocation2 + $0x280] sm:$0xff] 0.0
          %360 = vst [vmem:[#allocation2 + $0x288] sm:$0xff] 0.0
          %361 = vst [vmem:[#allocation2 + $0x290] sm:$0xff] 0.0
          %362 = vst [vmem:[#allocation2 + $0x298] sm:$0xff] 0.0
          %363 = vst [vmem:[#allocation2 + $0x2a0] sm:$0xff] 0.0
          %364 = vst [vmem:[#allocation2 + $0x2a8] sm:$0xff] 0.0
          %365 = vst [vmem:[#allocation2 + $0x2b0] sm:$0xff] 0.0
          %366 = vst [vmem:[#allocation2 + $0x2b8] sm:$0xff] 0.0
          %367 = vst [vmem:[#allocation2 + $0x2c0] sm:$0xff] 0.0
          %368 = vst [vmem:[#allocation2 + $0x2c8] sm:$0xff] 0.0
          %369 = vst [vmem:[#allocation2 + $0x2d0] sm:$0xff] 0.0
          %370 = vst [vmem:[#allocation2 + $0x2d8] sm:$0xff] 0.0
          %371 = vst [vmem:[#allocation2 + $0x2e0] sm:$0xff] 0.0
          %372 = vst [vmem:[#allocation2 + $0x2e8] sm:$0xff] 0.0
          %373 = vst [vmem:[#allocation2 + $0x2f0] sm:$0xff] 0.0
          %374 = vst [vmem:[#allocation2 + $0x2f8] sm:$0xff] 0.0
        $region48: #{tpu_custom_call.1} parent=31 // pred_fallthru
          _
        %v375 = vld [vmem:[#allocation2] sm:$0xff]
        %v376 = vld [vmem:[#allocation2 + $0x8] sm:$0xff]
        %v377 = vld [vmem:[#allocation2 + $0x10] sm:$0xff]
        %v378 = vld [vmem:[#allocation2 + $0x18] sm:$0xff]
        %v379 = vld [vmem:[#allocation2 + $0x20] sm:$0xff]
        %v380 = vld [vmem:[#allocation2 + $0x28] sm:$0xff]
        %v381 = vld [vmem:[#allocation2 + $0x30] sm:$0xff]
        %v382 = vld [vmem:[#allocation2 + $0x38] sm:$0xff]
        %v383 = vld [vmem:[#allocation2 + $0x40] sm:$0xff]
        %v384 = vld [vmem:[#allocation2 + $0x48] sm:$0xff]
        %v385 = vld [vmem:[#allocation2 + $0x50] sm:$0xff]
        %v386 = vld [vmem:[#allocation2 + $0x58] sm:$0xff]
        %v387 = vld [vmem:[#allocation2 + $0x60] sm:$0xff]
        %v388 = vld [vmem:[#allocation2 + $0x68] sm:$0xff]
        %v389 = vld [vmem:[#allocation2 + $0x70] sm:$0xff]
        %v390 = vld [vmem:[#allocation2 + $0x78] sm:$0xff]
        %v391 = vld [vmem:[#allocation2 + $0x80] sm:$0xff]
        %v392 = vld [vmem:[#allocation2 + $0x88] sm:$0xff]
        %v393 = vld [vmem:[#allocation2 + $0x90] sm:$0xff]
        %v394 = vld [vmem:[#allocation2 + $0x98] sm:$0xff]
        %v395 = vld [vmem:[#allocation2 + $0xa0] sm:$0xff]
        %v396 = vld [vmem:[#allocation2 + $0xa8] sm:$0xff]
        %v397 = vld [vmem:[#allocation2 + $0xb0] sm:$0xff]
        %v398 = vld [vmem:[#allocation2 + $0xb8] sm:$0xff]
        %v399 = vld [vmem:[#allocation2 + $0xc0] sm:$0xff]
        %v400 = vld [vmem:[#allocation2 + $0xc8] sm:$0xff]
        %v401 = vld [vmem:[#allocation2 + $0xd0] sm:$0xff]
        %v402 = vld [vmem:[#allocation2 + $0xd8] sm:$0xff]
        %v403 = vld [vmem:[#allocation2 + $0xe0] sm:$0xff]
        %v404 = vld [vmem:[#allocation2 + $0xe8] sm:$0xff]
        %v405 = vld [vmem:[#allocation2 + $0xf0] sm:$0xff]
        %v406 = vld [vmem:[#allocation2 + $0xf8] sm:$0xff]
        %v407 = vld [vmem:[#allocation2 + $0x100] sm:$0xff]
        %v408 = vld [vmem:[#allocation2 + $0x108] sm:$0xff]
        %v409 = vld [vmem:[#allocation2 + $0x110] sm:$0xff]
        %v410 = vld [vmem:[#allocation2 + $0x118] sm:$0xff]
        %v411 = vld [vmem:[#allocation2 + $0x120] sm:$0xff]
        %v412 = vld [vmem:[#allocation2 + $0x128] sm:$0xff]
        %v413 = vld [vmem:[#allocation2 + $0x130] sm:$0xff]
        %v414 = vld [vmem:[#allocation2 + $0x138] sm:$0xff]
        %v415 = vld [vmem:[#allocation2 + $0x140] sm:$0xff]
        %v416 = vld [vmem:[#allocation2 + $0x148] sm:$0xff]
        %v417 = vld [vmem:[#allocation2 + $0x150] sm:$0xff]
        %v418 = vld [vmem:[#allocation2 + $0x158] sm:$0xff]
        %v419 = vld [vmem:[#allocation2 + $0x160] sm:$0xff]
        %v420 = vld [vmem:[#allocation2 + $0x168] sm:$0xff]
        %v421 = vld [vmem:[#allocation2 + $0x170] sm:$0xff]
        %v422 = vld [vmem:[#allocation2 + $0x178] sm:$0xff]
        %v423 = vld [vmem:[#allocation2 + $0x180] sm:$0xff]
        %v424 = vld [vmem:[#allocation2 + $0x188] sm:$0xff]
        %v425 = vld [vmem:[#allocation2 + $0x190] sm:$0xff]
        %v426 = vld [vmem:[#allocation2 + $0x198] sm:$0xff]
        %v427 = vld [vmem:[#allocation2 + $0x1a0] sm:$0xff]
        %v428 = vld [vmem:[#allocation2 + $0x1a8] sm:$0xff]
        %v429 = vld [vmem:[#allocation2 + $0x1b0] sm:$0xff]
        %v430 = vld [vmem:[#allocation2 + $0x1b8] sm:$0xff]
        %v431 = vld [vmem:[#allocation2 + $0x1c0] sm:$0xff]
        %v432 = vld [vmem:[#allocation2 + $0x1c8] sm:$0xff]
        %v433 = vld [vmem:[#allocation2 + $0x1d0] sm:$0xff]
        %v434 = vld [vmem:[#allocation2 + $0x1d8] sm:$0xff]
        %v435 = vld [vmem:[#allocation2 + $0x1e0] sm:$0xff]
        %v436 = vld [vmem:[#allocation2 + $0x1e8] sm:$0xff]
        %v437 = vld [vmem:[#allocation2 + $0x1f0] sm:$0xff]
        %v438 = vld [vmem:[#allocation2 + $0x1f8] sm:$0xff]
        %v439 = vld [vmem:[#allocation2 + $0x200] sm:$0xff]
        %v440 = vld [vmem:[#allocation2 + $0x208] sm:$0xff]
        %v441 = vld [vmem:[#allocation2 + $0x210] sm:$0xff]
        %v442 = vld [vmem:[#allocation2 + $0x218] sm:$0xff]
        %v443 = vld [vmem:[#allocation2 + $0x220] sm:$0xff]
        %v444 = vld [vmem:[#allocation2 + $0x228] sm:$0xff]
        %v445 = vld [vmem:[#allocation2 + $0x230] sm:$0xff]
        %v446 = vld [vmem:[#allocation2 + $0x238] sm:$0xff]
        %v447 = vld [vmem:[#allocation2 + $0x240] sm:$0xff]
        %v448 = vld [vmem:[#allocation2 + $0x248] sm:$0xff]
        %v449 = vld [vmem:[#allocation2 + $0x250] sm:$0xff]
        %v450 = vld [vmem:[#allocation2 + $0x258] sm:$0xff]
        %v451 = vld [vmem:[#allocation2 + $0x260] sm:$0xff]
        %v452 = vld [vmem:[#allocation2 + $0x268] sm:$0xff]
        %v453 = vld [vmem:[#allocation2 + $0x270] sm:$0xff]
        %v454 = vld [vmem:[#allocation2 + $0x278] sm:$0xff]
        %v455 = vld [vmem:[#allocation2 + $0x280] sm:$0xff]
        %v456 = vld [vmem:[#allocation2 + $0x288] sm:$0xff]
        %v457 = vld [vmem:[#allocation2 + $0x290] sm:$0xff]
        %v458 = vld [vmem:[#allocation2 + $0x298] sm:$0xff]
        %v459 = vld [vmem:[#allocation2 + $0x2a0] sm:$0xff]
        %v460 = vld [vmem:[#allocation2 + $0x2a8] sm:$0xff]
        %v461 = vld [vmem:[#allocation2 + $0x2b0] sm:$0xff]
        %v462 = vld [vmem:[#allocation2 + $0x2b8] sm:$0xff]
        %v463 = vld [vmem:[#allocation2 + $0x2c0] sm:$0xff]
        %v464 = vld [vmem:[#allocation2 + $0x2c8] sm:$0xff]
        %v465 = vld [vmem:[#allocation2 + $0x2d0] sm:$0xff]
        %v466 = vld [vmem:[#allocation2 + $0x2d8] sm:$0xff]
        %v467 = vld [vmem:[#allocation2 + $0x2e0] sm:$0xff]
        %v468 = vld [vmem:[#allocation2 + $0x2e8] sm:$0xff]
        %v469 = vld [vmem:[#allocation2 + $0x2f0] sm:$0xff]
        %v470 = vld [vmem:[#allocation2 + $0x2f8] sm:$0xff]
        %v471 = vld [vmem:[%s234] sm:$0xff]
        %v472 = vld [vmem:[%s234 + $0x8] sm:$0xff]
        %v473 = vld [vmem:[%s234 + $0x10] sm:$0xff]
        %v474 = vld [vmem:[%s234 + $0x18] sm:$0xff]
        %v475 = vld [vmem:[%s234 + $0x20] sm:$0xff]
        %v476 = vld [vmem:[%s234 + $0x28] sm:$0xff]
        %v477 = vld [vmem:[%s234 + $0x30] sm:$0xff]
        %v478 = vld [vmem:[%s234 + $0x38] sm:$0xff]
        %v479 = vld [vmem:[%s234 + $0x40] sm:$0xff]
        %v480 = vld [vmem:[%s234 + $0x48] sm:$0xff]
        %v481 = vld [vmem:[%s234 + $0x50] sm:$0xff]
        %v482 = vld [vmem:[%s234 + $0x58] sm:$0xff]
        %v483 = vld [vmem:[%s234 + $0x60] sm:$0xff]
        %v484 = vld [vmem:[%s234 + $0x68] sm:$0xff]
        %v485 = vld [vmem:[%s234 + $0x70] sm:$0xff]
        %v486 = vld [vmem:[%s234 + $0x78] sm:$0xff]
        %v487 = vld [vmem:[#allocation6] sm:$0xff]
        %v488 = vld [vmem:[#allocation6 + $0x8] sm:$0xff]
        %v489 = vld [vmem:[#allocation6 + $0x10] sm:$0xff]
        %v490 = vld [vmem:[#allocation6 + $0x18] sm:$0xff]
        %v491 = vld [vmem:[#allocation6 + $0x20] sm:$0xff]
        %v492 = vld [vmem:[#allocation6 + $0x28] sm:$0xff]
        %v493 = vld [vmem:[#allocation6 + $0x30] sm:$0xff]
        %v494 = vld [vmem:[#allocation6 + $0x38] sm:$0xff]
        %v495 = vld [vmem:[#allocation6 + $0x40] sm:$0xff]
        %v496 = vld [vmem:[#allocation6 + $0x48] sm:$0xff]
        %v497 = vld [vmem:[#allocation6 + $0x50] sm:$0xff]
        %v498 = vld [vmem:[#allocation6 + $0x58] sm:$0xff]
        %v499 = vld [vmem:[#allocation6 + $0x60] sm:$0xff]
        %v500 = vld [vmem:[#allocation6 + $0x68] sm:$0xff]
        %v501 = vld [vmem:[#allocation6 + $0x70] sm:$0xff]
        %v502 = vld [vmem:[#allocation6 + $0x78] sm:$0xff]
        %v503 = vld [vmem:[#allocation6 + $0x80] sm:$0xff]
        %v504 = vld [vmem:[#allocation6 + $0x88] sm:$0xff]
        %v505 = vld [vmem:[#allocation6 + $0x90] sm:$0xff]
        %v506 = vld [vmem:[#allocation6 + $0x98] sm:$0xff]
        %v507 = vld [vmem:[#allocation6 + $0xa0] sm:$0xff]
        %v508 = vld [vmem:[#allocation6 + $0xa8] sm:$0xff]
        %v509 = vld [vmem:[#allocation6 + $0xb0] sm:$0xff]
        %v510 = vld [vmem:[#allocation6 + $0xb8] sm:$0xff]
        %v511 = vld [vmem:[#allocation6 + $0xc0] sm:$0xff]
        %v512 = vld [vmem:[#allocation6 + $0xc8] sm:$0xff]
        %v513 = vld [vmem:[#allocation6 + $0xd0] sm:$0xff]
        %v514 = vld [vmem:[#allocation6 + $0xd8] sm:$0xff]
        %v515 = vld [vmem:[#allocation6 + $0xe0] sm:$0xff]
        %v516 = vld [vmem:[#allocation6 + $0xe8] sm:$0xff]
        %v517 = vld [vmem:[#allocation6 + $0xf0] sm:$0xff]
        %v518 = vld [vmem:[#allocation6 + $0xf8] sm:$0xff]
        %v519 = vld [vmem:[#allocation6 + $0x100] sm:$0xff]
        %v520 = vld [vmem:[#allocation6 + $0x108] sm:$0xff]
        %v521 = vld [vmem:[#allocation6 + $0x110] sm:$0xff]
        %v522 = vld [vmem:[#allocation6 + $0x118] sm:$0xff]
        %v523 = vld [vmem:[#allocation6 + $0x120] sm:$0xff]
        %v524 = vld [vmem:[#allocation6 + $0x128] sm:$0xff]
        %v525 = vld [vmem:[#allocation6 + $0x130] sm:$0xff]
        %v526 = vld [vmem:[#allocation6 + $0x138] sm:$0xff]
        %v527 = vld [vmem:[#allocation6 + $0x140] sm:$0xff]
        %v528 = vld [vmem:[#allocation6 + $0x148] sm:$0xff]
        %v529 = vld [vmem:[#allocation6 + $0x150] sm:$0xff]
        %v530 = vld [vmem:[#allocation6 + $0x158] sm:$0xff]
        %v531 = vld [vmem:[#allocation6 + $0x160] sm:$0xff]
        %v532 = vld [vmem:[#allocation6 + $0x168] sm:$0xff]
        %v533 = vld [vmem:[#allocation6 + $0x170] sm:$0xff]
        %v534 = vld [vmem:[#allocation6 + $0x178] sm:$0xff]
        %v535 = vld [vmem:[#allocation6 + $0x180] sm:$0xff]
        %v536 = vld [vmem:[#allocation6 + $0x188] sm:$0xff]
        %v537 = vld [vmem:[#allocation6 + $0x190] sm:$0xff]
        %v538 = vld [vmem:[#allocation6 + $0x198] sm:$0xff]
        %v539 = vld [vmem:[#allocation6 + $0x1a0] sm:$0xff]
        %v540 = vld [vmem:[#allocation6 + $0x1a8] sm:$0xff]
        %v541 = vld [vmem:[#allocation6 + $0x1b0] sm:$0xff]
        %v542 = vld [vmem:[#allocation6 + $0x1b8] sm:$0xff]
        %v543 = vld [vmem:[#allocation6 + $0x1c0] sm:$0xff]
        %v544 = vld [vmem:[#allocation6 + $0x1c8] sm:$0xff]
        %v545 = vld [vmem:[#allocation6 + $0x1d0] sm:$0xff]
        %v546 = vld [vmem:[#allocation6 + $0x1d8] sm:$0xff]
        %v547 = vld [vmem:[#allocation6 + $0x1e0] sm:$0xff]
        %v548 = vld [vmem:[#allocation6 + $0x1e8] sm:$0xff]
        %v549 = vld [vmem:[#allocation6 + $0x1f0] sm:$0xff]
        %v550 = vld [vmem:[#allocation6 + $0x1f8] sm:$0xff]
        %v551 = vld [vmem:[#allocation6 + $0x200] sm:$0xff]
        %v552 = vld [vmem:[#allocation6 + $0x208] sm:$0xff]
        %v553 = vld [vmem:[#allocation6 + $0x210] sm:$0xff]
        %v554 = vld [vmem:[#allocation6 + $0x218] sm:$0xff]
        %v555 = vld [vmem:[#allocation6 + $0x220] sm:$0xff]
        %v556 = vld [vmem:[#allocation6 + $0x228] sm:$0xff]
        %v557 = vld [vmem:[#allocation6 + $0x230] sm:$0xff]
        %v558 = vld [vmem:[#allocation6 + $0x238] sm:$0xff]
        %v559 = vld [vmem:[#allocation6 + $0x240] sm:$0xff]
        %v560 = vld [vmem:[#allocation6 + $0x248] sm:$0xff]
        %v561 = vld [vmem:[#allocation6 + $0x250] sm:$0xff]
        %v562 = vld [vmem:[#allocation6 + $0x258] sm:$0xff]
        %v563 = vld [vmem:[#allocation6 + $0x260] sm:$0xff]
        %v564 = vld [vmem:[#allocation6 + $0x268] sm:$0xff]
        %v565 = vld [vmem:[#allocation6 + $0x270] sm:$0xff]
        %v566 = vld [vmem:[#allocation6 + $0x278] sm:$0xff]
        %v567 = vld [vmem:[#allocation6 + $0x280] sm:$0xff]
        %v568 = vld [vmem:[#allocation6 + $0x288] sm:$0xff]
        %v569 = vld [vmem:[#allocation6 + $0x290] sm:$0xff]
        %v570 = vld [vmem:[#allocation6 + $0x298] sm:$0xff]
        %v571 = vld [vmem:[#allocation6 + $0x2a0] sm:$0xff]
        %v572 = vld [vmem:[#allocation6 + $0x2a8] sm:$0xff]
        %v573 = vld [vmem:[#allocation6 + $0x2b0] sm:$0xff]
        %v574 = vld [vmem:[#allocation6 + $0x2b8] sm:$0xff]
        %v575 = vld [vmem:[#allocation6 + $0x2c0] sm:$0xff]
        %v576 = vld [vmem:[#allocation6 + $0x2c8] sm:$0xff]
        %v577 = vld [vmem:[#allocation6 + $0x2d0] sm:$0xff]
        %v578 = vld [vmem:[#allocation6 + $0x2d8] sm:$0xff]
        %v579 = vld [vmem:[#allocation6 + $0x2e0] sm:$0xff]
        %v580 = vld [vmem:[#allocation6 + $0x2e8] sm:$0xff]
        %v581 = vld [vmem:[#allocation6 + $0x2f0] sm:$0xff]
        %v582 = vld [vmem:[#allocation6 + $0x2f8] sm:$0xff]
        %v599 = vunpack.c.l.b16 %v471
        %v600 = vunpack.c.h.b16 %v471
        %v601 = vunpack.c.l.b16 %v472
        %v602 = vunpack.c.h.b16 %v472
        %v603 = vunpack.c.l.b16 %v473
        %v604 = vunpack.c.h.b16 %v473
        %v605 = vunpack.c.l.b16 %v474
        %v606 = vunpack.c.h.b16 %v474
        %v607 = vunpack.c.l.b16 %v475
        %v608 = vunpack.c.h.b16 %v475
        %v609 = vunpack.c.l.b16 %v476
        %v610 = vunpack.c.h.b16 %v476
        %v611 = vunpack.c.l.b16 %v477
        %v612 = vunpack.c.h.b16 %v477
        %v613 = vunpack.c.l.b16 %v478
        %v614 = vunpack.c.h.b16 %v478
        %v615 = vunpack.c.l.b16 %v479
        %v616 = vunpack.c.h.b16 %v479
        %v617 = vunpack.c.l.b16 %v480
        %v618 = vunpack.c.h.b16 %v480
        %v619 = vunpack.c.l.b16 %v481
        %v620 = vunpack.c.h.b16 %v481
        %v621 = vunpack.c.l.b16 %v482
        %v622 = vunpack.c.h.b16 %v482
        %v623 = vunpack.c.l.b16 %v483
        %v624 = vunpack.c.h.b16 %v483
        %v625 = vunpack.c.l.b16 %v484
        %v626 = vunpack.c.h.b16 %v484
        %v627 = vunpack.c.l.b16 %v485
        %v628 = vunpack.c.h.b16 %v485
        %v629 = vunpack.c.l.b16 %v486
        %v630 = vunpack.c.h.b16 %v486
        %v631 = vpack.c.b16 %v601, %v599
        %v632 = vpack.c.b16 %v602, %v600
        %v633 = vpack.c.b16 %v605, %v603
        %v634 = vpack.c.b16 %v606, %v604
        %v635 = vpack.c.b16 %v609, %v607
        %v636 = vpack.c.b16 %v610, %v608
        %v637 = vpack.c.b16 %v613, %v611
        %v638 = vpack.c.b16 %v614, %v612
        %v639 = vpack.c.b16 %v617, %v615
        %v640 = vpack.c.b16 %v618, %v616
        %v641 = vpack.c.b16 %v621, %v619
        %v642 = vpack.c.b16 %v622, %v620
        %v643 = vpack.c.b16 %v625, %v623
        %v644 = vpack.c.b16 %v626, %v624
        %v645 = vpack.c.b16 %v629, %v627
        %v646 = vpack.c.b16 %v630, %v628
        %v759 = vunpack.c.l.b16 %v487
        %v760 = vunpack.c.h.b16 %v487
        %v761 = vunpack.c.l.b16 %v488
        %v762 = vunpack.c.h.b16 %v488
        %v763 = vunpack.c.l.b16 %v489
        %v764 = vunpack.c.h.b16 %v489
        %v765 = vunpack.c.l.b16 %v490
        %v766 = vunpack.c.h.b16 %v490
        %v767 = vunpack.c.l.b16 %v491
        %v768 = vunpack.c.h.b16 %v491
        %v769 = vunpack.c.l.b16 %v492
        %v770 = vunpack.c.h.b16 %v492
        %v771 = vunpack.c.l.b16 %v493
        %v772 = vunpack.c.h.b16 %v493
        %v773 = vunpack.c.l.b16 %v494
        %v774 = vunpack.c.h.b16 %v494
        %v775 = vunpack.c.l.b16 %v495
        %v776 = vunpack.c.h.b16 %v495
        %v777 = vunpack.c.l.b16 %v496
        %v778 = vunpack.c.h.b16 %v496
        %v779 = vunpack.c.l.b16 %v497
        %v780 = vunpack.c.h.b16 %v497
        %v781 = vunpack.c.l.b16 %v498
        %v782 = vunpack.c.h.b16 %v498
        %v783 = vunpack.c.l.b16 %v499
        %v784 = vunpack.c.h.b16 %v499
        %v785 = vunpack.c.l.b16 %v500
        %v786 = vunpack.c.h.b16 %v500
        %v787 = vunpack.c.l.b16 %v501
        %v788 = vunpack.c.h.b16 %v501
        %v789 = vunpack.c.l.b16 %v502
        %v790 = vunpack.c.h.b16 %v502
        %v791 = vunpack.c.l.b16 %v503
        %v792 = vunpack.c.h.b16 %v503
        %v793 = vunpack.c.l.b16 %v504
        %v794 = vunpack.c.h.b16 %v504
        %v795 = vunpack.c.l.b16 %v505
        %v796 = vunpack.c.h.b16 %v505
        %v797 = vunpack.c.l.b16 %v506
        %v798 = vunpack.c.h.b16 %v506
        %v799 = vunpack.c.l.b16 %v507
        %v800 = vunpack.c.h.b16 %v507
        %v801 = vunpack.c.l.b16 %v508
        %v802 = vunpack.c.h.b16 %v508
        %v803 = vunpack.c.l.b16 %v509
        %v804 = vunpack.c.h.b16 %v509
        %v805 = vunpack.c.l.b16 %v510
        %v806 = vunpack.c.h.b16 %v510
        %v807 = vunpack.c.l.b16 %v511
        %v808 = vunpack.c.h.b16 %v511
        %v809 = vunpack.c.l.b16 %v512
        %v810 = vunpack.c.h.b16 %v512
        %v811 = vunpack.c.l.b16 %v513
        %v812 = vunpack.c.h.b16 %v513
        %v813 = vunpack.c.l.b16 %v514
        %v814 = vunpack.c.h.b16 %v514
        %v815 = vunpack.c.l.b16 %v515
        %v816 = vunpack.c.h.b16 %v515
        %v817 = vunpack.c.l.b16 %v516
        %v818 = vunpack.c.h.b16 %v516
        %v819 = vunpack.c.l.b16 %v517
        %v820 = vunpack.c.h.b16 %v517
        %v821 = vunpack.c.l.b16 %v518
        %v822 = vunpack.c.h.b16 %v518
        %v823 = vunpack.c.l.b16 %v519
        %v824 = vunpack.c.h.b16 %v519
        %v825 = vunpack.c.l.b16 %v520
        %v826 = vunpack.c.h.b16 %v520
        %v827 = vunpack.c.l.b16 %v521
        %v828 = vunpack.c.h.b16 %v521
        %v829 = vunpack.c.l.b16 %v522
        %v830 = vunpack.c.h.b16 %v522
        %v831 = vunpack.c.l.b16 %v523
        %v832 = vunpack.c.h.b16 %v523
        %v833 = vunpack.c.l.b16 %v524
        %v834 = vunpack.c.h.b16 %v524
        %v835 = vunpack.c.l.b16 %v525
        %v836 = vunpack.c.h.b16 %v525
        %v837 = vunpack.c.l.b16 %v526
        %v838 = vunpack.c.h.b16 %v526
        %v839 = vunpack.c.l.b16 %v527
        %v840 = vunpack.c.h.b16 %v527
        %v841 = vunpack.c.l.b16 %v528
        %v842 = vunpack.c.h.b16 %v528
        %v843 = vunpack.c.l.b16 %v529
        %v844 = vunpack.c.h.b16 %v529
        %v845 = vunpack.c.l.b16 %v530
        %v846 = vunpack.c.h.b16 %v530
        %v847 = vunpack.c.l.b16 %v531
        %v848 = vunpack.c.h.b16 %v531
        %v849 = vunpack.c.l.b16 %v532
        %v850 = vunpack.c.h.b16 %v532
        %v851 = vunpack.c.l.b16 %v533
        %v852 = vunpack.c.h.b16 %v533
        %v853 = vunpack.c.l.b16 %v534
        %v854 = vunpack.c.h.b16 %v534
        %v855 = vunpack.c.l.b16 %v535
        %v856 = vunpack.c.h.b16 %v535
        %v857 = vunpack.c.l.b16 %v536
        %v858 = vunpack.c.h.b16 %v536
        %v859 = vunpack.c.l.b16 %v537
        %v860 = vunpack.c.h.b16 %v537
        %v861 = vunpack.c.l.b16 %v538
        %v862 = vunpack.c.h.b16 %v538
        %v863 = vunpack.c.l.b16 %v539
        %v864 = vunpack.c.h.b16 %v539
        %v865 = vunpack.c.l.b16 %v540
        %v866 = vunpack.c.h.b16 %v540
        %v867 = vunpack.c.l.b16 %v541
        %v868 = vunpack.c.h.b16 %v541
        %v869 = vunpack.c.l.b16 %v542
        %v870 = vunpack.c.h.b16 %v542
        %v871 = vunpack.c.l.b16 %v543
        %v872 = vunpack.c.h.b16 %v543
        %v873 = vunpack.c.l.b16 %v544
        %v874 = vunpack.c.h.b16 %v544
        %v875 = vunpack.c.l.b16 %v545
        %v876 = vunpack.c.h.b16 %v545
        %v877 = vunpack.c.l.b16 %v546
        %v878 = vunpack.c.h.b16 %v546
        %v879 = vunpack.c.l.b16 %v547
        %v880 = vunpack.c.h.b16 %v547
        %v881 = vunpack.c.l.b16 %v548
        %v882 = vunpack.c.h.b16 %v548
        %v883 = vunpack.c.l.b16 %v549
        %v884 = vunpack.c.h.b16 %v549
        %v885 = vunpack.c.l.b16 %v550
        %v886 = vunpack.c.h.b16 %v550
        %v887 = vunpack.c.l.b16 %v551
        %v888 = vunpack.c.h.b16 %v551
        %v889 = vunpack.c.l.b16 %v552
        %v890 = vunpack.c.h.b16 %v552
        %v891 = vunpack.c.l.b16 %v553
        %v892 = vunpack.c.h.b16 %v553
        %v893 = vunpack.c.l.b16 %v554
        %v894 = vunpack.c.h.b16 %v554
        %v895 = vunpack.c.l.b16 %v555
        %v896 = vunpack.c.h.b16 %v555
        %v897 = vunpack.c.l.b16 %v556
        %v898 = vunpack.c.h.b16 %v556
        %v899 = vunpack.c.l.b16 %v557
        %v900 = vunpack.c.h.b16 %v557
        %v901 = vunpack.c.l.b16 %v558
        %v902 = vunpack.c.h.b16 %v558
        %v903 = vunpack.c.l.b16 %v559
        %v904 = vunpack.c.h.b16 %v559
        %v905 = vunpack.c.l.b16 %v560
        %v906 = vunpack.c.h.b16 %v560
        %v907 = vunpack.c.l.b16 %v561
        %v908 = vunpack.c.h.b16 %v561
        %v909 = vunpack.c.l.b16 %v562
        %v910 = vunpack.c.h.b16 %v562
        %v911 = vunpack.c.l.b16 %v563
        %v912 = vunpack.c.h.b16 %v563
        %v913 = vunpack.c.l.b16 %v564
        %v914 = vunpack.c.h.b16 %v564
        %v915 = vunpack.c.l.b16 %v565
        %v916 = vunpack.c.h.b16 %v565
        %v917 = vunpack.c.l.b16 %v566
        %v918 = vunpack.c.h.b16 %v566
        %v919 = vunpack.c.l.b16 %v567
        %v920 = vunpack.c.h.b16 %v567
        %v921 = vunpack.c.l.b16 %v568
        %v922 = vunpack.c.h.b16 %v568
        %v923 = vunpack.c.l.b16 %v569
        %v924 = vunpack.c.h.b16 %v569
        %v925 = vunpack.c.l.b16 %v570
        %v926 = vunpack.c.h.b16 %v570
        %v927 = vunpack.c.l.b16 %v571
        %v928 = vunpack.c.h.b16 %v571
        %v929 = vunpack.c.l.b16 %v572
        %v930 = vunpack.c.h.b16 %v572
        %v931 = vunpack.c.l.b16 %v573
        %v932 = vunpack.c.h.b16 %v573
        %v933 = vunpack.c.l.b16 %v574
        %v934 = vunpack.c.h.b16 %v574
        %v935 = vunpack.c.l.b16 %v575
        %v936 = vunpack.c.h.b16 %v575
        %v937 = vunpack.c.l.b16 %v576
        %v938 = vunpack.c.h.b16 %v576
        %v939 = vunpack.c.l.b16 %v577
        %v940 = vunpack.c.h.b16 %v577
        %v941 = vunpack.c.l.b16 %v578
        %v942 = vunpack.c.h.b16 %v578
        %v943 = vunpack.c.l.b16 %v579
        %v944 = vunpack.c.h.b16 %v579
        %v945 = vunpack.c.l.b16 %v580
        %v946 = vunpack.c.h.b16 %v580
        %v947 = vunpack.c.l.b16 %v581
        %v948 = vunpack.c.h.b16 %v581
        %v949 = vunpack.c.l.b16 %v582
        %v950 = vunpack.c.h.b16 %v582
        %v951 = vpack.c.b16 %v765, %v759
        %v952 = vpack.c.b16 %v766, %v760
        %v953 = vpack.c.b16 %v767, %v761
        %v954 = vpack.c.b16 %v768, %v762
        %v955 = vpack.c.b16 %v769, %v763
        %v956 = vpack.c.b16 %v770, %v764
        %v957 = vpack.c.b16 %v777, %v771
        %v958 = vpack.c.b16 %v778, %v772
        %v959 = vpack.c.b16 %v779, %v773
        %v960 = vpack.c.b16 %v780, %v774
        %v961 = vpack.c.b16 %v781, %v775
        %v962 = vpack.c.b16 %v782, %v776
        %v963 = vpack.c.b16 %v789, %v783
        %v964 = vpack.c.b16 %v790, %v784
        %v965 = vpack.c.b16 %v791, %v785
        %v966 = vpack.c.b16 %v792, %v786
        %v967 = vpack.c.b16 %v793, %v787
        %v968 = vpack.c.b16 %v794, %v788
        %v969 = vpack.c.b16 %v801, %v795
        %v970 = vpack.c.b16 %v802, %v796
        %v971 = vpack.c.b16 %v803, %v797
        %v972 = vpack.c.b16 %v804, %v798
        %v973 = vpack.c.b16 %v805, %v799
        %v974 = vpack.c.b16 %v806, %v800
        %v975 = vpack.c.b16 %v813, %v807
        %v976 = vpack.c.b16 %v814, %v808
        %v977 = vpack.c.b16 %v815, %v809
        %v978 = vpack.c.b16 %v816, %v810
        %v979 = vpack.c.b16 %v817, %v811
        %v980 = vpack.c.b16 %v818, %v812
        %v981 = vpack.c.b16 %v825, %v819
        %v982 = vpack.c.b16 %v826, %v820
        %v983 = vpack.c.b16 %v827, %v821
        %v984 = vpack.c.b16 %v828, %v822
        %v985 = vpack.c.b16 %v829, %v823
        %v986 = vpack.c.b16 %v830, %v824
        %v987 = vpack.c.b16 %v837, %v831
        %v988 = vpack.c.b16 %v838, %v832
        %v989 = vpack.c.b16 %v839, %v833
        %v990 = vpack.c.b16 %v840, %v834
        %v991 = vpack.c.b16 %v841, %v835
        %v992 = vpack.c.b16 %v842, %v836
        %v993 = vpack.c.b16 %v849, %v843
        %v994 = vpack.c.b16 %v850, %v844
        %v995 = vpack.c.b16 %v851, %v845
        %v996 = vpack.c.b16 %v852, %v846
        %v997 = vpack.c.b16 %v853, %v847
        %v998 = vpack.c.b16 %v854, %v848
        %v999 = vpack.c.b16 %v861, %v855
        %v1000 = vpack.c.b16 %v862, %v856
        %v1001 = vpack.c.b16 %v863, %v857
        %v1002 = vpack.c.b16 %v864, %v858
        %v1003 = vpack.c.b16 %v865, %v859
        %v1004 = vpack.c.b16 %v866, %v860
        %v1005 = vpack.c.b16 %v873, %v867
        %v1006 = vpack.c.b16 %v874, %v868
        %v1007 = vpack.c.b16 %v875, %v869
        %v1008 = vpack.c.b16 %v876, %v870
        %v1009 = vpack.c.b16 %v877, %v871
        %v1010 = vpack.c.b16 %v878, %v872
        %v1011 = vpack.c.b16 %v885, %v879
        %v1012 = vpack.c.b16 %v886, %v880
        %v1013 = vpack.c.b16 %v887, %v881
        %v1014 = vpack.c.b16 %v888, %v882
        %v1015 = vpack.c.b16 %v889, %v883
        %v1016 = vpack.c.b16 %v890, %v884
        %v1017 = vpack.c.b16 %v897, %v891
        %v1018 = vpack.c.b16 %v898, %v892
        %v1019 = vpack.c.b16 %v899, %v893
        %v1020 = vpack.c.b16 %v900, %v894
        %v1021 = vpack.c.b16 %v901, %v895
        %v1022 = vpack.c.b16 %v902, %v896
        %v1023 = vpack.c.b16 %v909, %v903
        %v1024 = vpack.c.b16 %v910, %v904
        %v1025 = vpack.c.b16 %v911, %v905
        %v1026 = vpack.c.b16 %v912, %v906
        %v1027 = vpack.c.b16 %v913, %v907
        %v1028 = vpack.c.b16 %v914, %v908
        %v1029 = vpack.c.b16 %v921, %v915
        %v1030 = vpack.c.b16 %v922, %v916
        %v1031 = vpack.c.b16 %v923, %v917
        %v1032 = vpack.c.b16 %v924, %v918
        %v1033 = vpack.c.b16 %v925, %v919
        %v1034 = vpack.c.b16 %v926, %v920
        %v1035 = vpack.c.b16 %v933, %v927
        %v1036 = vpack.c.b16 %v934, %v928
        %v1037 = vpack.c.b16 %v935, %v929
        %v1038 = vpack.c.b16 %v936, %v930
        %v1039 = vpack.c.b16 %v937, %v931
        %v1040 = vpack.c.b16 %v938, %v932
        %v1041 = vpack.c.b16 %v945, %v939
        %v1042 = vpack.c.b16 %v946, %v940
        %v1043 = vpack.c.b16 %v947, %v941
        %v1044 = vpack.c.b16 %v948, %v942
        %v1045 = vpack.c.b16 %v949, %v943
        %v1046 = vpack.c.b16 %v950, %v944
        %1143 = vmatpush.bf16.msra.mxu0 %v993
        %1144 = vmatpush.bf16.msra.mxu0 %v987
        %1145 = vmatpush.bf16.msra.mxu0 %v981
        %1146 = vmatpush.bf16.msra.mxu0 %v975
        %1147 = vmatpush.bf16.msra.mxu0 %v969
        %1148 = vmatpush.bf16.msra.mxu0 %v963
        %1149 = vmatpush.bf16.msra.mxu0 %v957
        %1150 = vmatpush.bf16.msra.mxu0 %v951
        %1151 = vmatmul.bf16.gmra.mxu0 %v631
        %v1152 = vpop.f32.mrf.mxu0
        %v1153 = vadd.f32 0.0, %v1152
        %v1154 = vpop.f32.mrf.mxu0
        %v1155 = vadd.f32 0.0, %v1154
        %1156 = vmatmul.bf16.gmra.mxu0 %v633
        %v1157 = vpop.f32.mrf.mxu0
        %v1158 = vadd.f32 0.0, %v1157
        %v1159 = vpop.f32.mrf.mxu0
        %v1160 = vadd.f32 0.0, %v1159
        %1161 = vmatmul.bf16.gmra.mxu0 %v635
        %v1162 = vpop.f32.mrf.mxu0
        %v1163 = vadd.f32 0.0, %v1162
        %v1164 = vpop.f32.mrf.mxu0
        %v1165 = vadd.f32 0.0, %v1164
        %1166 = vmatmul.bf16.gmra.mxu0 %v637
        %v1167 = vpop.f32.mrf.mxu0
        %v1168 = vadd.f32 0.0, %v1167
        %v1169 = vpop.f32.mrf.mxu0
        %v1170 = vadd.f32 0.0, %v1169
        %1171 = vmatmul.bf16.gmra.mxu0 %v639
        %v1172 = vpop.f32.mrf.mxu0
        %v1173 = vadd.f32 0.0, %v1172
        %v1174 = vpop.f32.mrf.mxu0
        %v1175 = vadd.f32 0.0, %v1174
        %1176 = vmatmul.bf16.gmra.mxu0 %v641
        %v1177 = vpop.f32.mrf.mxu0
        %v1178 = vadd.f32 0.0, %v1177
        %v1179 = vpop.f32.mrf.mxu0
        %v1180 = vadd.f32 0.0, %v1179
        %1181 = vmatmul.bf16.gmra.mxu0 %v643
        %v1182 = vpop.f32.mrf.mxu0
        %v1183 = vadd.f32 0.0, %v1182
        %v1184 = vpop.f32.mrf.mxu0
        %v1185 = vadd.f32 0.0, %v1184
        %1186 = vmatmul.bf16.gmra.mxu0 %v645
        %v1187 = vpop.f32.mrf.mxu0
        %v1188 = vadd.f32 0.0, %v1187
        %v1189 = vpop.f32.mrf.mxu0
        %v1190 = vadd.f32 0.0, %v1189
        %1191 = vdwg.mxu0
        %1192 = vmatpush.bf16.msra.mxu0 %v1041
        %1193 = vmatpush.bf16.msra.mxu0 %v1035
        %1194 = vmatpush.bf16.msra.mxu0 %v1029
        %1195 = vmatpush.bf16.msra.mxu0 %v1023
        %1196 = vmatpush.bf16.msra.mxu0 %v1017
        %1197 = vmatpush.bf16.msra.mxu0 %v1011
        %1198 = vmatpush.bf16.msra.mxu0 %v1005
        %1199 = vmatpush.bf16.msra.mxu0 %v999
        %1200 = vmatmul.bf16.gmra.mxu0 %v632
        %v1201 = vpop.f32.mrf.mxu0
        %v1202 = vadd.f32 %v1153, %v1201
        %v1203 = vpop.f32.mrf.mxu0
        %v1204 = vadd.f32 %v1155, %v1203
        %1205 = vmatmul.bf16.gmra.mxu0 %v634
        %v1206 = vpop.f32.mrf.mxu0
        %v1207 = vadd.f32 %v1158, %v1206
        %v1208 = vpop.f32.mrf.mxu0
        %v1209 = vadd.f32 %v1160, %v1208
        %1210 = vmatmul.bf16.gmra.mxu0 %v636
        %v1211 = vpop.f32.mrf.mxu0
        %v1212 = vadd.f32 %v1163, %v1211
        %v1213 = vpop.f32.mrf.mxu0
        %v1214 = vadd.f32 %v1165, %v1213
        %1215 = vmatmul.bf16.gmra.mxu0 %v638
        %v1216 = vpop.f32.mrf.mxu0
        %v1217 = vadd.f32 %v1168, %v1216
        %v1218 = vpop.f32.mrf.mxu0
        %v1219 = vadd.f32 %v1170, %v1218
        %1220 = vmatmul.bf16.gmra.mxu0 %v640
        %v1221 = vpop.f32.mrf.mxu0
        %v1222 = vadd.f32 %v1173, %v1221
        %v1223 = vpop.f32.mrf.mxu0
        %v1224 = vadd.f32 %v1175, %v1223
        %1225 = vmatmul.bf16.gmra.mxu0 %v642
        %v1226 = vpop.f32.mrf.mxu0
        %v1227 = vadd.f32 %v1178, %v1226
        %v1228 = vpop.f32.mrf.mxu0
        %v1229 = vadd.f32 %v1180, %v1228
        %1230 = vmatmul.bf16.gmra.mxu0 %v644
        %v1231 = vpop.f32.mrf.mxu0
        %v1232 = vadd.f32 %v1183, %v1231
        %v1233 = vpop.f32.mrf.mxu0
        %v1234 = vadd.f32 %v1185, %v1233
        %1235 = vmatmul.bf16.gmra.mxu0 %v646
        %v1236 = vpop.f32.mrf.mxu0
        %v1237 = vadd.f32 %v1188, %v1236
        %v1238 = vpop.f32.mrf.mxu0
        %v1239 = vadd.f32 %v1190, %v1238
        %1240 = vdwg.mxu0
        %1241 = vmatpush.bf16.msra.mxu0 %v994
        %1242 = vmatpush.bf16.msra.mxu0 %v988
        %1243 = vmatpush.bf16.msra.mxu0 %v982
        %1244 = vmatpush.bf16.msra.mxu0 %v976
        %1245 = vmatpush.bf16.msra.mxu0 %v970
        %1246 = vmatpush.bf16.msra.mxu0 %v964
        %1247 = vmatpush.bf16.msra.mxu0 %v958
        %1248 = vmatpush.bf16.msra.mxu0 %v952
        %1249 = vmatmul.bf16.gmra.mxu0 %v631
        %v1250 = vpop.f32.mrf.mxu0
        %v1251 = vadd.f32 0.0, %v1250
        %v1252 = vpop.f32.mrf.mxu0
        %v1253 = vadd.f32 0.0, %v1252
        %1254 = vmatmul.bf16.gmra.mxu0 %v633
        %v1255 = vpop.f32.mrf.mxu0
        %v1256 = vadd.f32 0.0, %v1255
        %v1257 = vpop.f32.mrf.mxu0
        %v1258 = vadd.f32 0.0, %v1257
        %1259 = vmatmul.bf16.gmra.mxu0 %v635
        %v1260 = vpop.f32.mrf.mxu0
        %v1261 = vadd.f32 0.0, %v1260
        %v1262 = vpop.f32.mrf.mxu0
        %v1263 = vadd.f32 0.0, %v1262
        %1264 = vmatmul.bf16.gmra.mxu0 %v637
        %v1265 = vpop.f32.mrf.mxu0
        %v1266 = vadd.f32 0.0, %v1265
        %v1267 = vpop.f32.mrf.mxu0
        %v1268 = vadd.f32 0.0, %v1267
        %1269 = vmatmul.bf16.gmra.mxu0 %v639
        %v1270 = vpop.f32.mrf.mxu0
        %v1271 = vadd.f32 0.0, %v1270
        %v1272 = vpop.f32.mrf.mxu0
        %v1273 = vadd.f32 0.0, %v1272
        %1274 = vmatmul.bf16.gmra.mxu0 %v641
        %v1275 = vpop.f32.mrf.mxu0
        %v1276 = vadd.f32 0.0, %v1275
        %v1277 = vpop.f32.mrf.mxu0
        %v1278 = vadd.f32 0.0, %v1277
        %1279 = vmatmul.bf16.gmra.mxu0 %v643
        %v1280 = vpop.f32.mrf.mxu0
        %v1281 = vadd.f32 0.0, %v1280
        %v1282 = vpop.f32.mrf.mxu0
        %v1283 = vadd.f32 0.0, %v1282
        %1284 = vmatmul.bf16.gmra.mxu0 %v645
        %v1285 = vpop.f32.mrf.mxu0
        %v1286 = vadd.f32 0.0, %v1285
        %v1287 = vpop.f32.mrf.mxu0
        %v1288 = vadd.f32 0.0, %v1287
        %1289 = vdwg.mxu0
        %1290 = vmatpush.bf16.msra.mxu0 %v1042
        %1291 = vmatpush.bf16.msra.mxu0 %v1036
        %1292 = vmatpush.bf16.msra.mxu0 %v1030
        %1293 = vmatpush.bf16.msra.mxu0 %v1024
        %1294 = vmatpush.bf16.msra.mxu0 %v1018
        %1295 = vmatpush.bf16.msra.mxu0 %v1012
        %1296 = vmatpush.bf16.msra.mxu0 %v1006
        %1297 = vmatpush.bf16.msra.mxu0 %v1000
        %1298 = vmatmul.bf16.gmra.mxu0 %v632
        %v1299 = vpop.f32.mrf.mxu0
        %v1300 = vadd.f32 %v1251, %v1299
        %v1301 = vpop.f32.mrf.mxu0
        %v1302 = vadd.f32 %v1253, %v1301
        %1303 = vmatmul.bf16.gmra.mxu0 %v634
        %v1304 = vpop.f32.mrf.mxu0
        %v1305 = vadd.f32 %v1256, %v1304
        %v1306 = vpop.f32.mrf.mxu0
        %v1307 = vadd.f32 %v1258, %v1306
        %1308 = vmatmul.bf16.gmra.mxu0 %v636
        %v1309 = vpop.f32.mrf.mxu0
        %v1310 = vadd.f32 %v1261, %v1309
        %v1311 = vpop.f32.mrf.mxu0
        %v1312 = vadd.f32 %v1263, %v1311
        %1313 = vmatmul.bf16.gmra.mxu0 %v638
        %v1314 = vpop.f32.mrf.mxu0
        %v1315 = vadd.f32 %v1266, %v1314
        %v1316 = vpop.f32.mrf.mxu0
        %v1317 = vadd.f32 %v1268, %v1316
        %1318 = vmatmul.bf16.gmra.mxu0 %v640
        %v1319 = vpop.f32.mrf.mxu0
        %v1320 = vadd.f32 %v1271, %v1319
        %v1321 = vpop.f32.mrf.mxu0
        %v1322 = vadd.f32 %v1273, %v1321
        %1323 = vmatmul.bf16.gmra.mxu0 %v642
        %v1324 = vpop.f32.mrf.mxu0
        %v1325 = vadd.f32 %v1276, %v1324
        %v1326 = vpop.f32.mrf.mxu0
        %v1327 = vadd.f32 %v1278, %v1326
        %1328 = vmatmul.bf16.gmra.mxu0 %v644
        %v1329 = vpop.f32.mrf.mxu0
        %v1330 = vadd.f32 %v1281, %v1329
        %v1331 = vpop.f32.mrf.mxu0
        %v1332 = vadd.f32 %v1283, %v1331
        %1333 = vmatmul.bf16.gmra.mxu0 %v646
        %v1334 = vpop.f32.mrf.mxu0
        %v1335 = vadd.f32 %v1286, %v1334
        %v1336 = vpop.f32.mrf.mxu0
        %v1337 = vadd.f32 %v1288, %v1336
        %1338 = vdwg.mxu0
        %1339 = vmatpush.bf16.msra.mxu0 %v995
        %1340 = vmatpush.bf16.msra.mxu0 %v989
        %1341 = vmatpush.bf16.msra.mxu0 %v983
        %1342 = vmatpush.bf16.msra.mxu0 %v977
        %1343 = vmatpush.bf16.msra.mxu0 %v971
        %1344 = vmatpush.bf16.msra.mxu0 %v965
        %1345 = vmatpush.bf16.msra.mxu0 %v959
        %1346 = vmatpush.bf16.msra.mxu0 %v953
        %1347 = vmatmul.bf16.gmra.mxu0 %v631
        %v1348 = vpop.f32.mrf.mxu0
        %v1349 = vadd.f32 0.0, %v1348
        %v1350 = vpop.f32.mrf.mxu0
        %v1351 = vadd.f32 0.0, %v1350
        %1352 = vmatmul.bf16.gmra.mxu0 %v633
        %v1353 = vpop.f32.mrf.mxu0
        %v1354 = vadd.f32 0.0, %v1353
        %v1355 = vpop.f32.mrf.mxu0
        %v1356 = vadd.f32 0.0, %v1355
        %1357 = vmatmul.bf16.gmra.mxu0 %v635
        %v1358 = vpop.f32.mrf.mxu0
        %v1359 = vadd.f32 0.0, %v1358
        %v1360 = vpop.f32.mrf.mxu0
        %v1361 = vadd.f32 0.0, %v1360
        %1362 = vmatmul.bf16.gmra.mxu0 %v637
        %v1363 = vpop.f32.mrf.mxu0
        %v1364 = vadd.f32 0.0, %v1363
        %v1365 = vpop.f32.mrf.mxu0
        %v1366 = vadd.f32 0.0, %v1365
        %1367 = vmatmul.bf16.gmra.mxu0 %v639
        %v1368 = vpop.f32.mrf.mxu0
        %v1369 = vadd.f32 0.0, %v1368
        %v1370 = vpop.f32.mrf.mxu0
        %v1371 = vadd.f32 0.0, %v1370
        %1372 = vmatmul.bf16.gmra.mxu0 %v641
        %v1373 = vpop.f32.mrf.mxu0
        %v1374 = vadd.f32 0.0, %v1373
        %v1375 = vpop.f32.mrf.mxu0
        %v1376 = vadd.f32 0.0, %v1375
        %1377 = vmatmul.bf16.gmra.mxu0 %v643
        %v1378 = vpop.f32.mrf.mxu0
        %v1379 = vadd.f32 0.0, %v1378
        %v1380 = vpop.f32.mrf.mxu0
        %v1381 = vadd.f32 0.0, %v1380
        %1382 = vmatmul.bf16.gmra.mxu0 %v645
        %v1383 = vpop.f32.mrf.mxu0
        %v1384 = vadd.f32 0.0, %v1383
        %v1385 = vpop.f32.mrf.mxu0
        %v1386 = vadd.f32 0.0, %v1385
        %1387 = vdwg.mxu0
        %1388 = vmatpush.bf16.msra.mxu0 %v1043
        %1389 = vmatpush.bf16.msra.mxu0 %v1037
        %1390 = vmatpush.bf16.msra.mxu0 %v1031
        %1391 = vmatpush.bf16.msra.mxu0 %v1025
        %1392 = vmatpush.bf16.msra.mxu0 %v1019
        %1393 = vmatpush.bf16.msra.mxu0 %v1013
        %1394 = vmatpush.bf16.msra.mxu0 %v1007
        %1395 = vmatpush.bf16.msra.mxu0 %v1001
        %1396 = vmatmul.bf16.gmra.mxu0 %v632
        %v1397 = vpop.f32.mrf.mxu0
        %v1398 = vadd.f32 %v1349, %v1397
        %v1399 = vpop.f32.mrf.mxu0
        %v1400 = vadd.f32 %v1351, %v1399
        %1401 = vmatmul.bf16.gmra.mxu0 %v634
        %v1402 = vpop.f32.mrf.mxu0
        %v1403 = vadd.f32 %v1354, %v1402
        %v1404 = vpop.f32.mrf.mxu0
        %v1405 = vadd.f32 %v1356, %v1404
        %1406 = vmatmul.bf16.gmra.mxu0 %v636
        %v1407 = vpop.f32.mrf.mxu0
        %v1408 = vadd.f32 %v1359, %v1407
        %v1409 = vpop.f32.mrf.mxu0
        %v1410 = vadd.f32 %v1361, %v1409
        %1411 = vmatmul.bf16.gmra.mxu0 %v638
        %v1412 = vpop.f32.mrf.mxu0
        %v1413 = vadd.f32 %v1364, %v1412
        %v1414 = vpop.f32.mrf.mxu0
        %v1415 = vadd.f32 %v1366, %v1414
        %1416 = vmatmul.bf16.gmra.mxu0 %v640
        %v1417 = vpop.f32.mrf.mxu0
        %v1418 = vadd.f32 %v1369, %v1417
        %v1419 = vpop.f32.mrf.mxu0
        %v1420 = vadd.f32 %v1371, %v1419
        %1421 = vmatmul.bf16.gmra.mxu0 %v642
        %v1422 = vpop.f32.mrf.mxu0
        %v1423 = vadd.f32 %v1374, %v1422
        %v1424 = vpop.f32.mrf.mxu0
        %v1425 = vadd.f32 %v1376, %v1424
        %1426 = vmatmul.bf16.gmra.mxu0 %v644
        %v1427 = vpop.f32.mrf.mxu0
        %v1428 = vadd.f32 %v1379, %v1427
        %v1429 = vpop.f32.mrf.mxu0
        %v1430 = vadd.f32 %v1381, %v1429
        %1431 = vmatmul.bf16.gmra.mxu0 %v646
        %v1432 = vpop.f32.mrf.mxu0
        %v1433 = vadd.f32 %v1384, %v1432
        %v1434 = vpop.f32.mrf.mxu0
        %v1435 = vadd.f32 %v1386, %v1434
        %1436 = vdwg.mxu0
        %1437 = vmatpush.bf16.msra.mxu0 %v996
        %1438 = vmatpush.bf16.msra.mxu0 %v990
        %1439 = vmatpush.bf16.msra.mxu0 %v984
        %1440 = vmatpush.bf16.msra.mxu0 %v978
        %1441 = vmatpush.bf16.msra.mxu0 %v972
        %1442 = vmatpush.bf16.msra.mxu0 %v966
        %1443 = vmatpush.bf16.msra.mxu0 %v960
        %1444 = vmatpush.bf16.msra.mxu0 %v954
        %1445 = vmatmul.bf16.gmra.mxu0 %v631
        %v1446 = vpop.f32.mrf.mxu0
        %v1447 = vadd.f32 0.0, %v1446
        %v1448 = vpop.f32.mrf.mxu0
        %v1449 = vadd.f32 0.0, %v1448
        %1450 = vmatmul.bf16.gmra.mxu0 %v633
        %v1451 = vpop.f32.mrf.mxu0
        %v1452 = vadd.f32 0.0, %v1451
        %v1453 = vpop.f32.mrf.mxu0
        %v1454 = vadd.f32 0.0, %v1453
        %1455 = vmatmul.bf16.gmra.mxu0 %v635
        %v1456 = vpop.f32.mrf.mxu0
        %v1457 = vadd.f32 0.0, %v1456
        %v1458 = vpop.f32.mrf.mxu0
        %v1459 = vadd.f32 0.0, %v1458
        %1460 = vmatmul.bf16.gmra.mxu0 %v637
        %v1461 = vpop.f32.mrf.mxu0
        %v1462 = vadd.f32 0.0, %v1461
        %v1463 = vpop.f32.mrf.mxu0
        %v1464 = vadd.f32 0.0, %v1463
        %1465 = vmatmul.bf16.gmra.mxu0 %v639
        %v1466 = vpop.f32.mrf.mxu0
        %v1467 = vadd.f32 0.0, %v1466
        %v1468 = vpop.f32.mrf.mxu0
        %v1469 = vadd.f32 0.0, %v1468
        %1470 = vmatmul.bf16.gmra.mxu0 %v641
        %v1471 = vpop.f32.mrf.mxu0
        %v1472 = vadd.f32 0.0, %v1471
        %v1473 = vpop.f32.mrf.mxu0
        %v1474 = vadd.f32 0.0, %v1473
        %1475 = vmatmul.bf16.gmra.mxu0 %v643
        %v1476 = vpop.f32.mrf.mxu0
        %v1477 = vadd.f32 0.0, %v1476
        %v1478 = vpop.f32.mrf.mxu0
        %v1479 = vadd.f32 0.0, %v1478
        %1480 = vmatmul.bf16.gmra.mxu0 %v645
        %v1481 = vpop.f32.mrf.mxu0
        %v1482 = vadd.f32 0.0, %v1481
        %v1483 = vpop.f32.mrf.mxu0
        %v1484 = vadd.f32 0.0, %v1483
        %1485 = vdwg.mxu0
        %1486 = vmatpush.bf16.msra.mxu0 %v1044
        %1487 = vmatpush.bf16.msra.mxu0 %v1038
        %1488 = vmatpush.bf16.msra.mxu0 %v1032
        %1489 = vmatpush.bf16.msra.mxu0 %v1026
        %1490 = vmatpush.bf16.msra.mxu0 %v1020
        %1491 = vmatpush.bf16.msra.mxu0 %v1014
        %1492 = vmatpush.bf16.msra.mxu0 %v1008
        %1493 = vmatpush.bf16.msra.mxu0 %v1002
        %1494 = vmatmul.bf16.gmra.mxu0 %v632
        %v1495 = vpop.f32.mrf.mxu0
        %v1496 = vadd.f32 %v1447, %v1495
        %v1497 = vpop.f32.mrf.mxu0
        %v1498 = vadd.f32 %v1449, %v1497
        %1499 = vmatmul.bf16.gmra.mxu0 %v634
        %v1500 = vpop.f32.mrf.mxu0
        %v1501 = vadd.f32 %v1452, %v1500
        %v1502 = vpop.f32.mrf.mxu0
        %v1503 = vadd.f32 %v1454, %v1502
        %1504 = vmatmul.bf16.gmra.mxu0 %v636
        %v1505 = vpop.f32.mrf.mxu0
        %v1506 = vadd.f32 %v1457, %v1505
        %v1507 = vpop.f32.mrf.mxu0
        %v1508 = vadd.f32 %v1459, %v1507
        %1509 = vmatmul.bf16.gmra.mxu0 %v638
        %v1510 = vpop.f32.mrf.mxu0
        %v1511 = vadd.f32 %v1462, %v1510
        %v1512 = vpop.f32.mrf.mxu0
        %v1513 = vadd.f32 %v1464, %v1512
        %1514 = vmatmul.bf16.gmra.mxu0 %v640
        %v1515 = vpop.f32.mrf.mxu0
        %v1516 = vadd.f32 %v1467, %v1515
        %v1517 = vpop.f32.mrf.mxu0
        %v1518 = vadd.f32 %v1469, %v1517
        %1519 = vmatmul.bf16.gmra.mxu0 %v642
        %v1520 = vpop.f32.mrf.mxu0
        %v1521 = vadd.f32 %v1472, %v1520
        %v1522 = vpop.f32.mrf.mxu0
        %v1523 = vadd.f32 %v1474, %v1522
        %1524 = vmatmul.bf16.gmra.mxu0 %v644
        %v1525 = vpop.f32.mrf.mxu0
        %v1526 = vadd.f32 %v1477, %v1525
        %v1527 = vpop.f32.mrf.mxu0
        %v1528 = vadd.f32 %v1479, %v1527
        %1529 = vmatmul.bf16.gmra.mxu0 %v646
        %v1530 = vpop.f32.mrf.mxu0
        %v1531 = vadd.f32 %v1482, %v1530
        %v1532 = vpop.f32.mrf.mxu0
        %v1533 = vadd.f32 %v1484, %v1532
        %1534 = vdwg.mxu0
        %1535 = vmatpush.bf16.msra.mxu0 %v997
        %1536 = vmatpush.bf16.msra.mxu0 %v991
        %1537 = vmatpush.bf16.msra.mxu0 %v985
        %1538 = vmatpush.bf16.msra.mxu0 %v979
        %1539 = vmatpush.bf16.msra.mxu0 %v973
        %1540 = vmatpush.bf16.msra.mxu0 %v967
        %1541 = vmatpush.bf16.msra.mxu0 %v961
        %1542 = vmatpush.bf16.msra.mxu0 %v955
        %1543 = vmatmul.bf16.gmra.mxu0 %v631
        %v1544 = vpop.f32.mrf.mxu0
        %v1545 = vadd.f32 0.0, %v1544
        %v1546 = vpop.f32.mrf.mxu0
        %v1547 = vadd.f32 0.0, %v1546
        %1548 = vmatmul.bf16.gmra.mxu0 %v633
        %v1549 = vpop.f32.mrf.mxu0
        %v1550 = vadd.f32 0.0, %v1549
        %v1551 = vpop.f32.mrf.mxu0
        %v1552 = vadd.f32 0.0, %v1551
        %1553 = vmatmul.bf16.gmra.mxu0 %v635
        %v1554 = vpop.f32.mrf.mxu0
        %v1555 = vadd.f32 0.0, %v1554
        %v1556 = vpop.f32.mrf.mxu0
        %v1557 = vadd.f32 0.0, %v1556
        %1558 = vmatmul.bf16.gmra.mxu0 %v637
        %v1559 = vpop.f32.mrf.mxu0
        %v1560 = vadd.f32 0.0, %v1559
        %v1561 = vpop.f32.mrf.mxu0
        %v1562 = vadd.f32 0.0, %v1561
        %1563 = vmatmul.bf16.gmra.mxu0 %v639
        %v1564 = vpop.f32.mrf.mxu0
        %v1565 = vadd.f32 0.0, %v1564
        %v1566 = vpop.f32.mrf.mxu0
        %v1567 = vadd.f32 0.0, %v1566
        %1568 = vmatmul.bf16.gmra.mxu0 %v641
        %v1569 = vpop.f32.mrf.mxu0
        %v1570 = vadd.f32 0.0, %v1569
        %v1571 = vpop.f32.mrf.mxu0
        %v1572 = vadd.f32 0.0, %v1571
        %1573 = vmatmul.bf16.gmra.mxu0 %v643
        %v1574 = vpop.f32.mrf.mxu0
        %v1575 = vadd.f32 0.0, %v1574
        %v1576 = vpop.f32.mrf.mxu0
        %v1577 = vadd.f32 0.0, %v1576
        %1578 = vmatmul.bf16.gmra.mxu0 %v645
        %v1579 = vpop.f32.mrf.mxu0
        %v1580 = vadd.f32 0.0, %v1579
        %v1581 = vpop.f32.mrf.mxu0
        %v1582 = vadd.f32 0.0, %v1581
        %1583 = vdwg.mxu0
        %1584 = vmatpush.bf16.msra.mxu0 %v1045
        %1585 = vmatpush.bf16.msra.mxu0 %v1039
        %1586 = vmatpush.bf16.msra.mxu0 %v1033
        %1587 = vmatpush.bf16.msra.mxu0 %v1027
        %1588 = vmatpush.bf16.msra.mxu0 %v1021
        %1589 = vmatpush.bf16.msra.mxu0 %v1015
        %1590 = vmatpush.bf16.msra.mxu0 %v1009
        %1591 = vmatpush.bf16.msra.mxu0 %v1003
        %1592 = vmatmul.bf16.gmra.mxu0 %v632
        %v1593 = vpop.f32.mrf.mxu0
        %v1594 = vadd.f32 %v1545, %v1593
        %v1595 = vpop.f32.mrf.mxu0
        %v1596 = vadd.f32 %v1547, %v1595
        %1597 = vmatmul.bf16.gmra.mxu0 %v634
        %v1598 = vpop.f32.mrf.mxu0
        %v1599 = vadd.f32 %v1550, %v1598
        %v1600 = vpop.f32.mrf.mxu0
        %v1601 = vadd.f32 %v1552, %v1600
        %1602 = vmatmul.bf16.gmra.mxu0 %v636
        %v1603 = vpop.f32.mrf.mxu0
        %v1604 = vadd.f32 %v1555, %v1603
        %v1605 = vpop.f32.mrf.mxu0
        %v1606 = vadd.f32 %v1557, %v1605
        %1607 = vmatmul.bf16.gmra.mxu0 %v638
        %v1608 = vpop.f32.mrf.mxu0
        %v1609 = vadd.f32 %v1560, %v1608
        %v1610 = vpop.f32.mrf.mxu0
        %v1611 = vadd.f32 %v1562, %v1610
        %1612 = vmatmul.bf16.gmra.mxu0 %v640
        %v1613 = vpop.f32.mrf.mxu0
        %v1614 = vadd.f32 %v1565, %v1613
        %v1615 = vpop.f32.mrf.mxu0
        %v1616 = vadd.f32 %v1567, %v1615
        %1617 = vmatmul.bf16.gmra.mxu0 %v642
        %v1618 = vpop.f32.mrf.mxu0
        %v1619 = vadd.f32 %v1570, %v1618
        %v1620 = vpop.f32.mrf.mxu0
        %v1621 = vadd.f32 %v1572, %v1620
        %1622 = vmatmul.bf16.gmra.mxu0 %v644
        %v1623 = vpop.f32.mrf.mxu0
        %v1624 = vadd.f32 %v1575, %v1623
        %v1625 = vpop.f32.mrf.mxu0
        %v1626 = vadd.f32 %v1577, %v1625
        %1627 = vmatmul.bf16.gmra.mxu0 %v646
        %v1628 = vpop.f32.mrf.mxu0
        %v1629 = vadd.f32 %v1580, %v1628
        %v1630 = vpop.f32.mrf.mxu0
        %v1631 = vadd.f32 %v1582, %v1630
        %1632 = vdwg.mxu0
        %1633 = vmatpush.bf16.msra.mxu0 %v998
        %1634 = vmatpush.bf16.msra.mxu0 %v992
        %1635 = vmatpush.bf16.msra.mxu0 %v986
        %1636 = vmatpush.bf16.msra.mxu0 %v980
        %1637 = vmatpush.bf16.msra.mxu0 %v974
        %1638 = vmatpush.bf16.msra.mxu0 %v968
        %1639 = vmatpush.bf16.msra.mxu0 %v962
        %1640 = vmatpush.bf16.msra.mxu0 %v956
        %1641 = vmatmul.bf16.gmra.mxu0 %v631
        %v1642 = vpop.f32.mrf.mxu0
        %v1643 = vadd.f32 0.0, %v1642
        %v1644 = vpop.f32.mrf.mxu0
        %v1645 = vadd.f32 0.0, %v1644
        %1646 = vmatmul.bf16.gmra.mxu0 %v633
        %v1647 = vpop.f32.mrf.mxu0
        %v1648 = vadd.f32 0.0, %v1647
        %v1649 = vpop.f32.mrf.mxu0
        %v1650 = vadd.f32 0.0, %v1649
        %1651 = vmatmul.bf16.gmra.mxu0 %v635
        %v1652 = vpop.f32.mrf.mxu0
        %v1653 = vadd.f32 0.0, %v1652
        %v1654 = vpop.f32.mrf.mxu0
        %v1655 = vadd.f32 0.0, %v1654
        %1656 = vmatmul.bf16.gmra.mxu0 %v637
        %v1657 = vpop.f32.mrf.mxu0
        %v1658 = vadd.f32 0.0, %v1657
        %v1659 = vpop.f32.mrf.mxu0
        %v1660 = vadd.f32 0.0, %v1659
        %1661 = vmatmul.bf16.gmra.mxu0 %v639
        %v1662 = vpop.f32.mrf.mxu0
        %v1663 = vadd.f32 0.0, %v1662
        %v1664 = vpop.f32.mrf.mxu0
        %v1665 = vadd.f32 0.0, %v1664
        %1666 = vmatmul.bf16.gmra.mxu0 %v641
        %v1667 = vpop.f32.mrf.mxu0
        %v1668 = vadd.f32 0.0, %v1667
        %v1669 = vpop.f32.mrf.mxu0
        %v1670 = vadd.f32 0.0, %v1669
        %1671 = vmatmul.bf16.gmra.mxu0 %v643
        %v1672 = vpop.f32.mrf.mxu0
        %v1673 = vadd.f32 0.0, %v1672
        %v1674 = vpop.f32.mrf.mxu0
        %v1675 = vadd.f32 0.0, %v1674
        %1676 = vmatmul.bf16.gmra.mxu0 %v645
        %v1677 = vpop.f32.mrf.mxu0
        %v1678 = vadd.f32 0.0, %v1677
        %v1679 = vpop.f32.mrf.mxu0
        %v1680 = vadd.f32 0.0, %v1679
        %1681 = vdwg.mxu0
        %1682 = vmatpush.bf16.msra.mxu0 %v1046
        %1683 = vmatpush.bf16.msra.mxu0 %v1040
        %1684 = vmatpush.bf16.msra.mxu0 %v1034
        %1685 = vmatpush.bf16.msra.mxu0 %v1028
        %1686 = vmatpush.bf16.msra.mxu0 %v1022
        %1687 = vmatpush.bf16.msra.mxu0 %v1016
        %1688 = vmatpush.bf16.msra.mxu0 %v1010
        %1689 = vmatpush.bf16.msra.mxu0 %v1004
        %1690 = vmatmul.bf16.gmra.mxu0 %v632
        %v1691 = vpop.f32.mrf.mxu0
        %v1692 = vadd.f32 %v1643, %v1691
        %v1693 = vpop.f32.mrf.mxu0
        %v1694 = vadd.f32 %v1645, %v1693
        %1695 = vmatmul.bf16.gmra.mxu0 %v634
        %v1696 = vpop.f32.mrf.mxu0
        %v1697 = vadd.f32 %v1648, %v1696
        %v1698 = vpop.f32.mrf.mxu0
        %v1699 = vadd.f32 %v1650, %v1698
        %1700 = vmatmul.bf16.gmra.mxu0 %v636
        %v1701 = vpop.f32.mrf.mxu0
        %v1702 = vadd.f32 %v1653, %v1701
        %v1703 = vpop.f32.mrf.mxu0
        %v1704 = vadd.f32 %v1655, %v1703
        %1705 = vmatmul.bf16.gmra.mxu0 %v638
        %v1706 = vpop.f32.mrf.mxu0
        %v1707 = vadd.f32 %v1658, %v1706
        %v1708 = vpop.f32.mrf.mxu0
        %v1709 = vadd.f32 %v1660, %v1708
        %1710 = vmatmul.bf16.gmra.mxu0 %v640
        %v1711 = vpop.f32.mrf.mxu0
        %v1712 = vadd.f32 %v1663, %v1711
        %v1713 = vpop.f32.mrf.mxu0
        %v1714 = vadd.f32 %v1665, %v1713
        %1715 = vmatmul.bf16.gmra.mxu0 %v642
        %v1716 = vpop.f32.mrf.mxu0
        %v1717 = vadd.f32 %v1668, %v1716
        %v1718 = vpop.f32.mrf.mxu0
        %v1719 = vadd.f32 %v1670, %v1718
        %1720 = vmatmul.bf16.gmra.mxu0 %v644
        %v1721 = vpop.f32.mrf.mxu0
        %v1722 = vadd.f32 %v1673, %v1721
        %v1723 = vpop.f32.mrf.mxu0
        %v1724 = vadd.f32 %v1675, %v1723
        %1725 = vmatmul.bf16.gmra.mxu0 %v646
        %v1726 = vpop.f32.mrf.mxu0
        %v1727 = vadd.f32 %v1678, %v1726
        %v1728 = vpop.f32.mrf.mxu0
        %v1729 = vadd.f32 %v1680, %v1728
        %1730 = vdwg.mxu0
        %v1731 = vadd.f32 %v375, %v1202
        %v1732 = vadd.f32 %v376, %v1300
        %v1733 = vadd.f32 %v377, %v1398
        %v1734 = vadd.f32 %v378, %v1496
        %v1735 = vadd.f32 %v379, %v1594
        %v1736 = vadd.f32 %v380, %v1692
        %v1737 = vadd.f32 %v381, %v1204
        %v1738 = vadd.f32 %v382, %v1302
        %v1739 = vadd.f32 %v383, %v1400
        %v1740 = vadd.f32 %v384, %v1498
        %v1741 = vadd.f32 %v385, %v1596
        %v1742 = vadd.f32 %v386, %v1694
        %v1743 = vadd.f32 %v387, %v1207
        %v1744 = vadd.f32 %v388, %v1305
        %v1745 = vadd.f32 %v389, %v1403
        %v1746 = vadd.f32 %v390, %v1501
        %v1747 = vadd.f32 %v391, %v1599
        %v1748 = vadd.f32 %v392, %v1697
        %v1749 = vadd.f32 %v393, %v1209
        %v1750 = vadd.f32 %v394, %v1307
        %v1751 = vadd.f32 %v395, %v1405
        %v1752 = vadd.f32 %v396, %v1503
        %v1753 = vadd.f32 %v397, %v1601
        %v1754 = vadd.f32 %v398, %v1699
        %v1755 = vadd.f32 %v399, %v1212
        %v1756 = vadd.f32 %v400, %v1310
        %v1757 = vadd.f32 %v401, %v1408
        %v1758 = vadd.f32 %v402, %v1506
        %v1759 = vadd.f32 %v403, %v1604
        %v1760 = vadd.f32 %v404, %v1702
        %v1761 = vadd.f32 %v405, %v1214
        %v1762 = vadd.f32 %v406, %v1312
        %v1763 = vadd.f32 %v407, %v1410
        %v1764 = vadd.f32 %v408, %v1508
        %v1765 = vadd.f32 %v409, %v1606
        %v1766 = vadd.f32 %v410, %v1704
        %v1767 = vadd.f32 %v411, %v1217
        %v1768 = vadd.f32 %v412, %v1315
        %v1769 = vadd.f32 %v413, %v1413
        %v1770 = vadd.f32 %v414, %v1511
        %v1771 = vadd.f32 %v415, %v1609
        %v1772 = vadd.f32 %v416, %v1707
        %v1773 = vadd.f32 %v417, %v1219
        %v1774 = vadd.f32 %v418, %v1317
        %v1775 = vadd.f32 %v419, %v1415
        %v1776 = vadd.f32 %v420, %v1513
        %v1777 = vadd.f32 %v421, %v1611
        %v1778 = vadd.f32 %v422, %v1709
        %v1779 = vadd.f32 %v423, %v1222
        %v1780 = vadd.f32 %v424, %v1320
        %v1781 = vadd.f32 %v425, %v1418
        %v1782 = vadd.f32 %v426, %v1516
        %v1783 = vadd.f32 %v427, %v1614
        %v1784 = vadd.f32 %v428, %v1712
        %v1785 = vadd.f32 %v429, %v1224
        %v1786 = vadd.f32 %v430, %v1322
        %v1787 = vadd.f32 %v431, %v1420
        %v1788 = vadd.f32 %v432, %v1518
        %v1789 = vadd.f32 %v433, %v1616
        %v1790 = vadd.f32 %v434, %v1714
        %v1791 = vadd.f32 %v435, %v1227
        %v1792 = vadd.f32 %v436, %v1325
        %v1793 = vadd.f32 %v437, %v1423
        %v1794 = vadd.f32 %v438, %v1521
        %v1795 = vadd.f32 %v439, %v1619
        %v1796 = vadd.f32 %v440, %v1717
        %v1797 = vadd.f32 %v441, %v1229
        %v1798 = vadd.f32 %v442, %v1327
        %v1799 = vadd.f32 %v443, %v1425
        %v1800 = vadd.f32 %v444, %v1523
        %v1801 = vadd.f32 %v445, %v1621
        %v1802 = vadd.f32 %v446, %v1719
        %v1803 = vadd.f32 %v447, %v1232
        %v1804 = vadd.f32 %v448, %v1330
        %v1805 = vadd.f32 %v449, %v1428
        %v1806 = vadd.f32 %v450, %v1526
        %v1807 = vadd.f32 %v451, %v1624
        %v1808 = vadd.f32 %v452, %v1722
        %v1809 = vadd.f32 %v453, %v1234
        %v1810 = vadd.f32 %v454, %v1332
        %v1811 = vadd.f32 %v455, %v1430
        %v1812 = vadd.f32 %v456, %v1528
        %v1813 = vadd.f32 %v457, %v1626
        %v1814 = vadd.f32 %v458, %v1724
        %v1815 = vadd.f32 %v459, %v1237
        %v1816 = vadd.f32 %v460, %v1335
        %v1817 = vadd.f32 %v461, %v1433
        %v1818 = vadd.f32 %v462, %v1531
        %v1819 = vadd.f32 %v463, %v1629
        %v1820 = vadd.f32 %v464, %v1727
        %v1821 = vadd.f32 %v465, %v1239
        %v1822 = vadd.f32 %v466, %v1337
        %v1823 = vadd.f32 %v467, %v1435
        %v1824 = vadd.f32 %v468, %v1533
        %v1825 = vadd.f32 %v469, %v1631
        %v1826 = vadd.f32 %v470, %v1729
        %1827 = vst [vmem:[#allocation2] sm:$0xff] %v1731
        %1828 = vst [vmem:[#allocation2 + $0x8] sm:$0xff] %v1732
        %1829 = vst [vmem:[#allocation2 + $0x10] sm:$0xff] %v1733
        %1830 = vst [vmem:[#allocation2 + $0x18] sm:$0xff] %v1734
        %1831 = vst [vmem:[#allocation2 + $0x20] sm:$0xff] %v1735
        %1832 = vst [vmem:[#allocation2 + $0x28] sm:$0xff] %v1736
        %1833 = vst [vmem:[#allocation2 + $0x30] sm:$0xff] %v1737
        %1834 = vst [vmem:[#allocation2 + $0x38] sm:$0xff] %v1738
        %1835 = vst [vmem:[#allocation2 + $0x40] sm:$0xff] %v1739
        %1836 = vst [vmem:[#allocation2 + $0x48] sm:$0xff] %v1740
        %1837 = vst [vmem:[#allocation2 + $0x50] sm:$0xff] %v1741
        %1838 = vst [vmem:[#allocation2 + $0x58] sm:$0xff] %v1742
        %1839 = vst [vmem:[#allocation2 + $0x60] sm:$0xff] %v1743
        %1840 = vst [vmem:[#allocation2 + $0x68] sm:$0xff] %v1744
        %1841 = vst [vmem:[#allocation2 + $0x70] sm:$0xff] %v1745
        %1842 = vst [vmem:[#allocation2 + $0x78] sm:$0xff] %v1746
        %1843 = vst [vmem:[#allocation2 + $0x80] sm:$0xff] %v1747
        %1844 = vst [vmem:[#allocation2 + $0x88] sm:$0xff] %v1748
        %1845 = vst [vmem:[#allocation2 + $0x90] sm:$0xff] %v1749
        %1846 = vst [vmem:[#allocation2 + $0x98] sm:$0xff] %v1750
        %1847 = vst [vmem:[#allocation2 + $0xa0] sm:$0xff] %v1751
        %1848 = vst [vmem:[#allocation2 + $0xa8] sm:$0xff] %v1752
        %1849 = vst [vmem:[#allocation2 + $0xb0] sm:$0xff] %v1753
        %1850 = vst [vmem:[#allocation2 + $0xb8] sm:$0xff] %v1754
        %1851 = vst [vmem:[#allocation2 + $0xc0] sm:$0xff] %v1755
        %1852 = vst [vmem:[#allocation2 + $0xc8] sm:$0xff] %v1756
        %1853 = vst [vmem:[#allocation2 + $0xd0] sm:$0xff] %v1757
        %1854 = vst [vmem:[#allocation2 + $0xd8] sm:$0xff] %v1758
        %1855 = vst [vmem:[#allocation2 + $0xe0] sm:$0xff] %v1759
        %1856 = vst [vmem:[#allocation2 + $0xe8] sm:$0xff] %v1760
        %1857 = vst [vmem:[#allocation2 + $0xf0] sm:$0xff] %v1761
        %1858 = vst [vmem:[#allocation2 + $0xf8] sm:$0xff] %v1762
        %1859 = vst [vmem:[#allocation2 + $0x100] sm:$0xff] %v1763
        %1860 = vst [vmem:[#allocation2 + $0x108] sm:$0xff] %v1764
        %1861 = vst [vmem:[#allocation2 + $0x110] sm:$0xff] %v1765
        %1862 = vst [vmem:[#allocation2 + $0x118] sm:$0xff] %v1766
        %1863 = vst [vmem:[#allocation2 + $0x120] sm:$0xff] %v1767
        %1864 = vst [vmem:[#allocation2 + $0x128] sm:$0xff] %v1768
        %1865 = vst [vmem:[#allocation2 + $0x130] sm:$0xff] %v1769
        %1866 = vst [vmem:[#allocation2 + $0x138] sm:$0xff] %v1770
        %1867 = vst [vmem:[#allocation2 + $0x140] sm:$0xff] %v1771
        %1868 = vst [vmem:[#allocation2 + $0x148] sm:$0xff] %v1772
        %1869 = vst [vmem:[#allocation2 + $0x150] sm:$0xff] %v1773
        %1870 = vst [vmem:[#allocation2 + $0x158] sm:$0xff] %v1774
        %1871 = vst [vmem:[#allocation2 + $0x160] sm:$0xff] %v1775
        %1872 = vst [vmem:[#allocation2 + $0x168] sm:$0xff] %v1776
        %1873 = vst [vmem:[#allocation2 + $0x170] sm:$0xff] %v1777
        %1874 = vst [vmem:[#allocation2 + $0x178] sm:$0xff] %v1778
        %1875 = vst [vmem:[#allocation2 + $0x180] sm:$0xff] %v1779
        %1876 = vst [vmem:[#allocation2 + $0x188] sm:$0xff] %v1780
        %1877 = vst [vmem:[#allocation2 + $0x190] sm:$0xff] %v1781
        %1878 = vst [vmem:[#allocation2 + $0x198] sm:$0xff] %v1782
        %1879 = vst [vmem:[#allocation2 + $0x1a0] sm:$0xff] %v1783
        %1880 = vst [vmem:[#allocation2 + $0x1a8] sm:$0xff] %v1784
        %1881 = vst [vmem:[#allocation2 + $0x1b0] sm:$0xff] %v1785
        %1882 = vst [vmem:[#allocation2 + $0x1b8] sm:$0xff] %v1786
        %1883 = vst [vmem:[#allocation2 + $0x1c0] sm:$0xff] %v1787
        %1884 = vst [vmem:[#allocation2 + $0x1c8] sm:$0xff] %v1788
        %1885 = vst [vmem:[#allocation2 + $0x1d0] sm:$0xff] %v1789
        %1886 = vst [vmem:[#allocation2 + $0x1d8] sm:$0xff] %v1790
        %1887 = vst [vmem:[#allocation2 + $0x1e0] sm:$0xff] %v1791
        %1888 = vst [vmem:[#allocation2 + $0x1e8] sm:$0xff] %v1792
        %1889 = vst [vmem:[#allocation2 + $0x1f0] sm:$0xff] %v1793
        %1890 = vst [vmem:[#allocation2 + $0x1f8] sm:$0xff] %v1794
        %1891 = vst [vmem:[#allocation2 + $0x200] sm:$0xff] %v1795
        %1892 = vst [vmem:[#allocation2 + $0x208] sm:$0xff] %v1796
        %1893 = vst [vmem:[#allocation2 + $0x210] sm:$0xff] %v1797
        %1894 = vst [vmem:[#allocation2 + $0x218] sm:$0xff] %v1798
        %1895 = vst [vmem:[#allocation2 + $0x220] sm:$0xff] %v1799
        %1896 = vst [vmem:[#allocation2 + $0x228] sm:$0xff] %v1800
        %1897 = vst [vmem:[#allocation2 + $0x230] sm:$0xff] %v1801
        %1898 = vst [vmem:[#allocation2 + $0x238] sm:$0xff] %v1802
        %1899 = vst [vmem:[#allocation2 + $0x240] sm:$0xff] %v1803
        %1900 = vst [vmem:[#allocation2 + $0x248] sm:$0xff] %v1804
        %1901 = vst [vmem:[#allocation2 + $0x250] sm:$0xff] %v1805
        %1902 = vst [vmem:[#allocation2 + $0x258] sm:$0xff] %v1806
        %1903 = vst [vmem:[#allocation2 + $0x260] sm:$0xff] %v1807
        %1904 = vst [vmem:[#allocation2 + $0x268] sm:$0xff] %v1808
        %1905 = vst [vmem:[#allocation2 + $0x270] sm:$0xff] %v1809
        %1906 = vst [vmem:[#allocation2 + $0x278] sm:$0xff] %v1810
        %1907 = vst [vmem:[#allocation2 + $0x280] sm:$0xff] %v1811
        %1908 = vst [vmem:[#allocation2 + $0x288] sm:$0xff] %v1812
        %1909 = vst [vmem:[#allocation2 + $0x290] sm:$0xff] %v1813
        %1910 = vst [vmem:[#allocation2 + $0x298] sm:$0xff] %v1814
        %1911 = vst [vmem:[#allocation2 + $0x2a0] sm:$0xff] %v1815
        %1912 = vst [vmem:[#allocation2 + $0x2a8] sm:$0xff] %v1816
        %1913 = vst [vmem:[#allocation2 + $0x2b0] sm:$0xff] %v1817
        %1914 = vst [vmem:[#allocation2 + $0x2b8] sm:$0xff] %v1818
        %1915 = vst [vmem:[#allocation2 + $0x2c0] sm:$0xff] %v1819
        %1916 = vst [vmem:[#allocation2 + $0x2c8] sm:$0xff] %v1820
        %1917 = vst [vmem:[#allocation2 + $0x2d0] sm:$0xff] %v1821
        %1918 = vst [vmem:[#allocation2 + $0x2d8] sm:$0xff] %v1822
        %1919 = vst [vmem:[#allocation2 + $0x2e0] sm:$0xff] %v1823
        %1920 = vst [vmem:[#allocation2 + $0x2e8] sm:$0xff] %v1824
        %1921 = vst [vmem:[#allocation2 + $0x2f0] sm:$0xff] %v1825
        %1922 = vst [vmem:[#allocation2 + $0x2f8] sm:$0xff] %v1826
        // Predicated region
        $region49: #{tpu_custom_call.1} parent=31 // pred_check
          %p1923 = pneg %p275
        $region50: #{tpu_custom_call.1} parent=31 // pred_check_branch
          %1925 = sbr.rel (%p1923) target = $region52
        $region51: #{tpu_custom_call.1} parent=31 // pred_region
          %v1926 = vld [vmem:[#allocation2] sm:$0xff]
          %v1927 = vld [vmem:[#allocation2 + $0x8] sm:$0xff]
          %v1928 = vld [vmem:[#allocation2 + $0x10] sm:$0xff]
          %v1929 = vld [vmem:[#allocation2 + $0x18] sm:$0xff]
          %v1930 = vld [vmem:[#allocation2 + $0x20] sm:$0xff]
          %v1931 = vld [vmem:[#allocation2 + $0x28] sm:$0xff]
          %v1932 = vld [vmem:[#allocation2 + $0x30] sm:$0xff]
          %v1933 = vld [vmem:[#allocation2 + $0x38] sm:$0xff]
          %v1934 = vld [vmem:[#allocation2 + $0x40] sm:$0xff]
          %v1935 = vld [vmem:[#allocation2 + $0x48] sm:$0xff]
          %v1936 = vld [vmem:[#allocation2 + $0x50] sm:$0xff]
          %v1937 = vld [vmem:[#allocation2 + $0x58] sm:$0xff]
          %v1938 = vld [vmem:[#allocation2 + $0x60] sm:$0xff]
          %v1939 = vld [vmem:[#allocation2 + $0x68] sm:$0xff]
          %v1940 = vld [vmem:[#allocation2 + $0x70] sm:$0xff]
          %v1941 = vld [vmem:[#allocation2 + $0x78] sm:$0xff]
          %v1942 = vld [vmem:[#allocation2 + $0x80] sm:$0xff]
          %v1943 = vld [vmem:[#allocation2 + $0x88] sm:$0xff]
          %v1944 = vld [vmem:[#allocation2 + $0x90] sm:$0xff]
          %v1945 = vld [vmem:[#allocation2 + $0x98] sm:$0xff]
          %v1946 = vld [vmem:[#allocation2 + $0xa0] sm:$0xff]
          %v1947 = vld [vmem:[#allocation2 + $0xa8] sm:$0xff]
          %v1948 = vld [vmem:[#allocation2 + $0xb0] sm:$0xff]
          %v1949 = vld [vmem:[#allocation2 + $0xb8] sm:$0xff]
          %v1950 = vld [vmem:[#allocation2 + $0xc0] sm:$0xff]
          %v1951 = vld [vmem:[#allocation2 + $0xc8] sm:$0xff]
          %v1952 = vld [vmem:[#allocation2 + $0xd0] sm:$0xff]
          %v1953 = vld [vmem:[#allocation2 + $0xd8] sm:$0xff]
          %v1954 = vld [vmem:[#allocation2 + $0xe0] sm:$0xff]
          %v1955 = vld [vmem:[#allocation2 + $0xe8] sm:$0xff]
          %v1956 = vld [vmem:[#allocation2 + $0xf0] sm:$0xff]
          %v1957 = vld [vmem:[#allocation2 + $0xf8] sm:$0xff]
          %v1958 = vld [vmem:[#allocation2 + $0x100] sm:$0xff]
          %v1959 = vld [vmem:[#allocation2 + $0x108] sm:$0xff]
          %v1960 = vld [vmem:[#allocation2 + $0x110] sm:$0xff]
          %v1961 = vld [vmem:[#allocation2 + $0x118] sm:$0xff]
          %v1962 = vld [vmem:[#allocation2 + $0x120] sm:$0xff]
          %v1963 = vld [vmem:[#allocation2 + $0x128] sm:$0xff]
          %v1964 = vld [vmem:[#allocation2 + $0x130] sm:$0xff]
          %v1965 = vld [vmem:[#allocation2 + $0x138] sm:$0xff]
          %v1966 = vld [vmem:[#allocation2 + $0x140] sm:$0xff]
          %v1967 = vld [vmem:[#allocation2 + $0x148] sm:$0xff]
          %v1968 = vld [vmem:[#allocation2 + $0x150] sm:$0xff]
          %v1969 = vld [vmem:[#allocation2 + $0x158] sm:$0xff]
          %v1970 = vld [vmem:[#allocation2 + $0x160] sm:$0xff]
          %v1971 = vld [vmem:[#allocation2 + $0x168] sm:$0xff]
          %v1972 = vld [vmem:[#allocation2 + $0x170] sm:$0xff]
          %v1973 = vld [vmem:[#allocation2 + $0x178] sm:$0xff]
          %v1974 = vld [vmem:[#allocation2 + $0x180] sm:$0xff]
          %v1975 = vld [vmem:[#allocation2 + $0x188] sm:$0xff]
          %v1976 = vld [vmem:[#allocation2 + $0x190] sm:$0xff]
          %v1977 = vld [vmem:[#allocation2 + $0x198] sm:$0xff]
          %v1978 = vld [vmem:[#allocation2 + $0x1a0] sm:$0xff]
          %v1979 = vld [vmem:[#allocation2 + $0x1a8] sm:$0xff]
          %v1980 = vld [vmem:[#allocation2 + $0x1b0] sm:$0xff]
          %v1981 = vld [vmem:[#allocation2 + $0x1b8] sm:$0xff]
          %v1982 = vld [vmem:[#allocation2 + $0x1c0] sm:$0xff]
          %v1983 = vld [vmem:[#allocation2 + $0x1c8] sm:$0xff]
          %v1984 = vld [vmem:[#allocation2 + $0x1d0] sm:$0xff]
          %v1985 = vld [vmem:[#allocation2 + $0x1d8] sm:$0xff]
          %v1986 = vld [vmem:[#allocation2 + $0x1e0] sm:$0xff]
          %v1987 = vld [vmem:[#allocation2 + $0x1e8] sm:$0xff]
          %v1988 = vld [vmem:[#allocation2 + $0x1f0] sm:$0xff]
          %v1989 = vld [vmem:[#allocation2 + $0x1f8] sm:$0xff]
          %v1990 = vld [vmem:[#allocation2 + $0x200] sm:$0xff]
          %v1991 = vld [vmem:[#allocation2 + $0x208] sm:$0xff]
          %v1992 = vld [vmem:[#allocation2 + $0x210] sm:$0xff]
          %v1993 = vld [vmem:[#allocation2 + $0x218] sm:$0xff]
          %v1994 = vld [vmem:[#allocation2 + $0x220] sm:$0xff]
          %v1995 = vld [vmem:[#allocation2 + $0x228] sm:$0xff]
          %v1996 = vld [vmem:[#allocation2 + $0x230] sm:$0xff]
          %v1997 = vld [vmem:[#allocation2 + $0x238] sm:$0xff]
          %v1998 = vld [vmem:[#allocation2 + $0x240] sm:$0xff]
          %v1999 = vld [vmem:[#allocation2 + $0x248] sm:$0xff]
          %v2000 = vld [vmem:[#allocation2 + $0x250] sm:$0xff]
          %v2001 = vld [vmem:[#allocation2 + $0x258] sm:$0xff]
          %v2002 = vld [vmem:[#allocation2 + $0x260] sm:$0xff]
          %v2003 = vld [vmem:[#allocation2 + $0x268] sm:$0xff]
          %v2004 = vld [vmem:[#allocation2 + $0x270] sm:$0xff]
          %v2005 = vld [vmem:[#allocation2 + $0x278] sm:$0xff]
          %v2006 = vld [vmem:[#allocation2 + $0x280] sm:$0xff]
          %v2007 = vld [vmem:[#allocation2 + $0x288] sm:$0xff]
          %v2008 = vld [vmem:[#allocation2 + $0x290] sm:$0xff]
          %v2009 = vld [vmem:[#allocation2 + $0x298] sm:$0xff]
          %v2010 = vld [vmem:[#allocation2 + $0x2a0] sm:$0xff]
          %v2011 = vld [vmem:[#allocation2 + $0x2a8] sm:$0xff]
          %v2012 = vld [vmem:[#allocation2 + $0x2b0] sm:$0xff]
          %v2013 = vld [vmem:[#allocation2 + $0x2b8] sm:$0xff]
          %v2014 = vld [vmem:[#allocation2 + $0x2c0] sm:$0xff]
          %v2015 = vld [vmem:[#allocation2 + $0x2c8] sm:$0xff]
          %v2016 = vld [vmem:[#allocation2 + $0x2d0] sm:$0xff]
          %v2017 = vld [vmem:[#allocation2 + $0x2d8] sm:$0xff]
          %v2018 = vld [vmem:[#allocation2 + $0x2e0] sm:$0xff]
          %v2019 = vld [vmem:[#allocation2 + $0x2e8] sm:$0xff]
          %v2020 = vld [vmem:[#allocation2 + $0x2f0] sm:$0xff]
          %v2021 = vld [vmem:[#allocation2 + $0x2f8] sm:$0xff]
          %v2022 = vld [vmem:[#allocation8] sm:$0x3f]
          %v2024 = vperm.slane %v2022, 0
          %v2025 = vperm.slane %v2022, 1
          %v2026 = vperm.slane %v2022, 2
          %v2027 = vperm.slane %v2022, 3
          %v2028 = vperm.slane %v2022, 4
          %v2029 = vperm.slane %v2022, 5
          %v2036 = vadd.f32 %v1926, %v2024
          %v2037 = vadd.f32 %v1927, %v2025
          %v2038 = vadd.f32 %v1928, %v2026
          %v2039 = vadd.f32 %v1929, %v2027
          %v2040 = vadd.f32 %v1930, %v2028
          %v2041 = vadd.f32 %v1931, %v2029
          %v2042 = vadd.f32 %v1932, %v2024
          %v2043 = vadd.f32 %v1933, %v2025
          %v2044 = vadd.f32 %v1934, %v2026
          %v2045 = vadd.f32 %v1935, %v2027
          %v2046 = vadd.f32 %v1936, %v2028
          %v2047 = vadd.f32 %v1937, %v2029
          %v2048 = vadd.f32 %v1938, %v2024
          %v2049 = vadd.f32 %v1939, %v2025
          %v2050 = vadd.f32 %v1940, %v2026
          %v2051 = vadd.f32 %v1941, %v2027
          %v2052 = vadd.f32 %v1942, %v2028
          %v2053 = vadd.f32 %v1943, %v2029
          %v2054 = vadd.f32 %v1944, %v2024
          %v2055 = vadd.f32 %v1945, %v2025
          %v2056 = vadd.f32 %v1946, %v2026
          %v2057 = vadd.f32 %v1947, %v2027
          %v2058 = vadd.f32 %v1948, %v2028
          %v2059 = vadd.f32 %v1949, %v2029
          %v2060 = vadd.f32 %v1950, %v2024
          %v2061 = vadd.f32 %v1951, %v2025
          %v2062 = vadd.f32 %v1952, %v2026
          %v2063 = vadd.f32 %v1953, %v2027
          %v2064 = vadd.f32 %v1954, %v2028
          %v2065 = vadd.f32 %v1955, %v2029
          %v2066 = vadd.f32 %v1956, %v2024
          %v2067 = vadd.f32 %v1957, %v2025
          %v2068 = vadd.f32 %v1958, %v2026
          %v2069 = vadd.f32 %v1959, %v2027
          %v2070 = vadd.f32 %v1960, %v2028
          %v2071 = vadd.f32 %v1961, %v2029
          %v2072 = vadd.f32 %v1962, %v2024
          %v2073 = vadd.f32 %v1963, %v2025
          %v2074 = vadd.f32 %v1964, %v2026
          %v2075 = vadd.f32 %v1965, %v2027
          %v2076 = vadd.f32 %v1966, %v2028
          %v2077 = vadd.f32 %v1967, %v2029
          %v2078 = vadd.f32 %v1968, %v2024
          %v2079 = vadd.f32 %v1969, %v2025
          %v2080 = vadd.f32 %v1970, %v2026
          %v2081 = vadd.f32 %v1971, %v2027
          %v2082 = vadd.f32 %v1972, %v2028
          %v2083 = vadd.f32 %v1973, %v2029
          %v2084 = vadd.f32 %v1974, %v2024
          %v2085 = vadd.f32 %v1975, %v2025
          %v2086 = vadd.f32 %v1976, %v2026
          %v2087 = vadd.f32 %v1977, %v2027
          %v2088 = vadd.f32 %v1978, %v2028
          %v2089 = vadd.f32 %v1979, %v2029
          %v2090 = vadd.f32 %v1980, %v2024
          %v2091 = vadd.f32 %v1981, %v2025
          %v2092 = vadd.f32 %v1982, %v2026
          %v2093 = vadd.f32 %v1983, %v2027
          %v2094 = vadd.f32 %v1984, %v2028
          %v2095 = vadd.f32 %v1985, %v2029
          %v2096 = vadd.f32 %v1986, %v2024
          %v2097 = vadd.f32 %v1987, %v2025
          %v2098 = vadd.f32 %v1988, %v2026
          %v2099 = vadd.f32 %v1989, %v2027
          %v2100 = vadd.f32 %v1990, %v2028
          %v2101 = vadd.f32 %v1991, %v2029
          %v2102 = vadd.f32 %v1992, %v2024
          %v2103 = vadd.f32 %v1993, %v2025
          %v2104 = vadd.f32 %v1994, %v2026
          %v2105 = vadd.f32 %v1995, %v2027
          %v2106 = vadd.f32 %v1996, %v2028
          %v2107 = vadd.f32 %v1997, %v2029
          %v2108 = vadd.f32 %v1998, %v2024
          %v2109 = vadd.f32 %v1999, %v2025
          %v2110 = vadd.f32 %v2000, %v2026
          %v2111 = vadd.f32 %v2001, %v2027
          %v2112 = vadd.f32 %v2002, %v2028
          %v2113 = vadd.f32 %v2003, %v2029
          %v2114 = vadd.f32 %v2004, %v2024
          %v2115 = vadd.f32 %v2005, %v2025
          %v2116 = vadd.f32 %v2006, %v2026
          %v2117 = vadd.f32 %v2007, %v2027
          %v2118 = vadd.f32 %v2008, %v2028
          %v2119 = vadd.f32 %v2009, %v2029
          %v2120 = vadd.f32 %v2010, %v2024
          %v2121 = vadd.f32 %v2011, %v2025
          %v2122 = vadd.f32 %v2012, %v2026
          %v2123 = vadd.f32 %v2013, %v2027
          %v2124 = vadd.f32 %v2014, %v2028
          %v2125 = vadd.f32 %v2015, %v2029
          %v2126 = vadd.f32 %v2016, %v2024
          %v2127 = vadd.f32 %v2017, %v2025
          %v2128 = vadd.f32 %v2018, %v2026
          %v2129 = vadd.f32 %v2019, %v2027
          %v2130 = vadd.f32 %v2020, %v2028
          %v2131 = vadd.f32 %v2021, %v2029
          %v2132 = vpack.c.bf16 %v2037, %v2036
          %v2133 = vpack.c.bf16 %v2039, %v2038
          %v2134 = vpack.c.bf16 %v2041, %v2040
          %v2135 = vpack.c.bf16 %v2043, %v2042
          %v2136 = vpack.c.bf16 %v2045, %v2044
          %v2137 = vpack.c.bf16 %v2047, %v2046
          %v2138 = vpack.c.bf16 %v2049, %v2048
          %v2139 = vpack.c.bf16 %v2051, %v2050
          %v2140 = vpack.c.bf16 %v2053, %v2052
          %v2141 = vpack.c.bf16 %v2055, %v2054
          %v2142 = vpack.c.bf16 %v2057, %v2056
          %v2143 = vpack.c.bf16 %v2059, %v2058
          %v2144 = vpack.c.bf16 %v2061, %v2060
          %v2145 = vpack.c.bf16 %v2063, %v2062
          %v2146 = vpack.c.bf16 %v2065, %v2064
          %v2147 = vpack.c.bf16 %v2067, %v2066
          %v2148 = vpack.c.bf16 %v2069, %v2068
          %v2149 = vpack.c.bf16 %v2071, %v2070
          %v2150 = vpack.c.bf16 %v2073, %v2072
          %v2151 = vpack.c.bf16 %v2075, %v2074
          %v2152 = vpack.c.bf16 %v2077, %v2076
          %v2153 = vpack.c.bf16 %v2079, %v2078
          %v2154 = vpack.c.bf16 %v2081, %v2080
          %v2155 = vpack.c.bf16 %v2083, %v2082
          %v2156 = vpack.c.bf16 %v2085, %v2084
          %v2157 = vpack.c.bf16 %v2087, %v2086
          %v2158 = vpack.c.bf16 %v2089, %v2088
          %v2159 = vpack.c.bf16 %v2091, %v2090
          %v2160 = vpack.c.bf16 %v2093, %v2092
          %v2161 = vpack.c.bf16 %v2095, %v2094
          %v2162 = vpack.c.bf16 %v2097, %v2096
          %v2163 = vpack.c.bf16 %v2099, %v2098
          %v2164 = vpack.c.bf16 %v2101, %v2100
          %v2165 = vpack.c.bf16 %v2103, %v2102
          %v2166 = vpack.c.bf16 %v2105, %v2104
          %v2167 = vpack.c.bf16 %v2107, %v2106
          %v2168 = vpack.c.bf16 %v2109, %v2108
          %v2169 = vpack.c.bf16 %v2111, %v2110
          %v2170 = vpack.c.bf16 %v2113, %v2112
          %v2171 = vpack.c.bf16 %v2115, %v2114
          %v2172 = vpack.c.bf16 %v2117, %v2116
          %v2173 = vpack.c.bf16 %v2119, %v2118
          %v2174 = vpack.c.bf16 %v2121, %v2120
          %v2175 = vpack.c.bf16 %v2123, %v2122
          %v2176 = vpack.c.bf16 %v2125, %v2124
          %v2177 = vpack.c.bf16 %v2127, %v2126
          %v2178 = vpack.c.bf16 %v2129, %v2128
          %v2179 = vpack.c.bf16 %v2131, %v2130
          %2180 = vst [vmem:[%s267] sm:$0xff] %v2132
          %2181 = vst [vmem:[%s267 + $0x8] sm:$0xff] %v2133
          %2182 = vst [vmem:[%s267 + $0x10] sm:$0xff] %v2134
          %2183 = vst [vmem:[%s267 + $0x18] sm:$0xff] %v2135
          %2184 = vst [vmem:[%s267 + $0x20] sm:$0xff] %v2136
          %2185 = vst [vmem:[%s267 + $0x28] sm:$0xff] %v2137
          %2186 = vst [vmem:[%s267 + $0x30] sm:$0xff] %v2138
          %2187 = vst [vmem:[%s267 + $0x38] sm:$0xff] %v2139
          %2188 = vst [vmem:[%s267 + $0x40] sm:$0xff] %v2140
          %2189 = vst [vmem:[%s267 + $0x48] sm:$0xff] %v2141
          %2190 = vst [vmem:[%s267 + $0x50] sm:$0xff] %v2142
          %2191 = vst [vmem:[%s267 + $0x58] sm:$0xff] %v2143
          %2192 = vst [vmem:[%s267 + $0x60] sm:$0xff] %v2144
          %2193 = vst [vmem:[%s267 + $0x68] sm:$0xff] %v2145
          %2194 = vst [vmem:[%s267 + $0x70] sm:$0xff] %v2146
          %2195 = vst [vmem:[%s267 + $0x78] sm:$0xff] %v2147
          %2196 = vst [vmem:[%s267 + $0x80] sm:$0xff] %v2148
          %2197 = vst [vmem:[%s267 + $0x88] sm:$0xff] %v2149
          %2198 = vst [vmem:[%s267 + $0x90] sm:$0xff] %v2150
          %2199 = vst [vmem:[%s267 + $0x98] sm:$0xff] %v2151
          %2200 = vst [vmem:[%s267 + $0xa0] sm:$0xff] %v2152
          %2201 = vst [vmem:[%s267 + $0xa8] sm:$0xff] %v2153
          %2202 = vst [vmem:[%s267 + $0xb0] sm:$0xff] %v2154
          %2203 = vst [vmem:[%s267 + $0xb8] sm:$0xff] %v2155
          %2204 = vst [vmem:[%s267 + $0xc0] sm:$0xff] %v2156
          %2205 = vst [vmem:[%s267 + $0xc8] sm:$0xff] %v2157
          %2206 = vst [vmem:[%s267 + $0xd0] sm:$0xff] %v2158
          %2207 = vst [vmem:[%s267 + $0xd8] sm:$0xff] %v2159
          %2208 = vst [vmem:[%s267 + $0xe0] sm:$0xff] %v2160
          %2209 = vst [vmem:[%s267 + $0xe8] sm:$0xff] %v2161
          %2210 = vst [vmem:[%s267 + $0xf0] sm:$0xff] %v2162
          %2211 = vst [vmem:[%s267 + $0xf8] sm:$0xff] %v2163
          %2212 = vst [vmem:[%s267 + $0x100] sm:$0xff] %v2164
          %2213 = vst [vmem:[%s267 + $0x108] sm:$0xff] %v2165
          %2214 = vst [vmem:[%s267 + $0x110] sm:$0xff] %v2166
          %2215 = vst [vmem:[%s267 + $0x118] sm:$0xff] %v2167
          %2216 = vst [vmem:[%s267 + $0x120] sm:$0xff] %v2168
          %2217 = vst [vmem:[%s267 + $0x128] sm:$0xff] %v2169
          %2218 = vst [vmem:[%s267 + $0x130] sm:$0xff] %v2170
          %2219 = vst [vmem:[%s267 + $0x138] sm:$0xff] %v2171
          %2220 = vst [vmem:[%s267 + $0x140] sm:$0xff] %v2172
          %2221 = vst [vmem:[%s267 + $0x148] sm:$0xff] %v2173
          %2222 = vst [vmem:[%s267 + $0x150] sm:$0xff] %v2174
          %2223 = vst [vmem:[%s267 + $0x158] sm:$0xff] %v2175
          %2224 = vst [vmem:[%s267 + $0x160] sm:$0xff] %v2176
          %2225 = vst [vmem:[%s267 + $0x168] sm:$0xff] %v2177
          %2226 = vst [vmem:[%s267 + $0x170] sm:$0xff] %v2178
          %2227 = vst [vmem:[%s267 + $0x178] sm:$0xff] %v2179
        $region52: #{tpu_custom_call.1} parent=31 // pred_fallthru
          _
        %s2228 = sand.u32 %s132, 1
        %s2229 = scalar_lea.sflag [#allocation5], %s2228
        %s2230 = sand.u32 %s132, 1
        %s2231 = smul.addr %s2230, 384
        %s2232 = scalar_lea.vmem [#allocation9], %s2231
        // Predicated region
        $region53: #{tpu_custom_call.1} parent=31 // pred_check
          %p2233 = pneg %p142
        $region54: #{tpu_custom_call.1} parent=31 // pred_check_branch
          %2235 = sbr.rel (%p2233) target = $region56
        $region55: #{tpu_custom_call.1} parent=31 // pred_region
          %s2236 = smul.u32 16, %s26
          %s2237 = smul.u32 6, %s27
          %2239 = vsyncadd %s2229, 0
          %s2240 = smul.addr %s2236, 6
          %s2241 = sadd.s32 %s2237, %s2240
          %s2242 = smul.addr %s2241, 4
          %s2243 = scalar_lea.hbm %s3, %s2242
          %s2244 = sshll.u32 %s2232, 4
          %s2245 = int_to_ptr.vmem [resolvable:$true] %s2244
          %s2246 = sshll.u32 %s2243, 4
          %s2247 = int_to_ptr.hbm [resolvable:$true] %s2246
          %2252 = dma.vmem_to_hbm [thread:$0]  %s2245, 6144, %s2247, %s2229, 384, 384, 24
        $region56: #{tpu_custom_call.1} parent=31 // pred_fallthru
          _
      $region32: #{tpu_custom_call.1} parent=5 // pred_fallthru
        _
      %p2253 = scmp.le.s32.totalorder 2, %s16
      // Predicated region
      $region57: #{tpu_custom_call.1} parent=5 // pred_check
        %p2254 = pneg %p2253
      $region58: #{tpu_custom_call.1} parent=5 // pred_check_branch
        %2256 = sbr.rel (%p2254) target = $region60
      $region59: #{tpu_custom_call.1} parent=5 // pred_region
        %s2257 = ssub.s32 %s16, 2
        // Predicated region
        $region61: #{tpu_custom_call.1} parent=59 // pred_check
          %p2258 = pneg %p148
        $region62: #{tpu_custom_call.1} parent=59 // pred_check_branch
          %2260 = sbr.rel (%p2258) target = $region64
        $region63: #{tpu_custom_call.1} parent=59 // pred_region
          %s2261 = sand.u32 %s133, 1
          %s2262 = scalar_lea.sflag [#allocation5], %s2261
          %s2263 = sand.u32 %s133, 1
          %s2264 = smul.addr %s2263, 384
          %s2265 = scalar_lea.vmem [#allocation9], %s2264
          %2267 = dma.done %s2262, 6144
        $region64: #{tpu_custom_call.1} parent=59 // pred_fallthru
          _
      $region60: #{tpu_custom_call.1} parent=5 // pred_fallthru
        _
    $region6: #{tpu_custom_call.1} parent=1 // loop_footer
      %s20 = sadd.s32 1, %s16
    $region7: #{tpu_custom_call.1} parent=1 // loop_footer_branch
      %15 = sbr.rel target = $region3
    $region8: #{tpu_custom_call.1} parent=1 // loop_exit
      _
    %2268 = vsyncpa [#allocation4], 1
    %s2269 = scalar_lea.sflag [#allocation4], 1
    %2270 = vsyncpa %s2269, 1
    %2271 = vsyncpa [#allocation7], 1
    %2272 = vsyncpa [#allocation5], 1
    %s2273 = scalar_lea.sflag [#allocation5], 1
    %2274 = vsyncpa %s2273, 1

</llo_original>
